<compile_context>
chip_gen: v5e
topology: v5e:2x2
jax: 0.10.0
libtpu: 0.0.40
codegen_flags: <defaults>
</compile_context>

<pallas_src>
import jax
import jax.numpy as jnp
from jax import lax
from jax.experimental import pallas as pl
from jax.experimental.pallas import tpu as pltpu

NEG = -1e30  # finite "minus infinity": keeps 0 * NEG == 0 inside the one-hot matmuls (no NaN)

# contract over the edge (lane) axis of both operands: [R, Et] x [N, Et] -> [R, N]
EDGE_CONTRACT = (((1,), (1,)), ((), ()))


def gatv2_kernel(xprojT_ref, att_ref, expand_ref, hsum_ref, idx_ref,
                 outT_ref, logits_ref,
                 m_scr, l_scr, acc_scr):
    HC, N = xprojT_ref.shape
    H = expand_ref.shape[1]
    Et = idx_ref.shape[1] // 2
    t = pl.program_id(0)
    nt = pl.num_programs(0)
    neg = jnp.float32(NEG)

    @pl.when(t == 0)
    def _init():
        m_scr[...] = jnp.full(m_scr.shape, neg, dtype=jnp.float32)
        l_scr[...] = jnp.zeros(l_scr.shape, dtype=jnp.float32)
        acc_scr[...] = jnp.zeros(acc_scr.shape, dtype=jnp.float32)

    # ---- gather/scatter masks built in-kernel from int32 indices (O(E) HBM traffic) ----
    # idx tile layout along lanes: [0:Et) = col (destination), [Et:2Et) = row (source).
    node_iota = lax.broadcasted_iota(jnp.int32, (N, 2 * Et), 0)
    ga_b = node_iota == idx_ref[...]                      # [N, 2Et] bool
    ga_bf = ga_b.astype(jnp.bfloat16)                     # bf16 one-hot -> full MXU rate
    coh_b = ga_b[:, :Et]                                  # [N, Et] destination mask
    coh_bf = ga_bf[:, :Et]
    coh_f32 = coh_bf.astype(jnp.float32)

    # ---- fused endpoint gather: x_j (from col) and x_i (from row) in ONE bf16 matmul ----
    xcat = jnp.dot(xprojT_ref[...], ga_bf,
                   preferred_element_type=jnp.float32)    # [HC, 2Et], f32 accumulation
    xjT = xcat[:, :Et]                                    # x_proj[col] (also aggregated below)
    xiT = xcat[:, Et:]                                    # x_proj[row]
    sT = xiT + xjT
    sT = jnp.where(sT > 0, sT, 0.2 * sT)                  # leaky_relu(0.2)

    # attention logits for all (zero-padded) heads; edges on lanes, full-sublane dense store
    logits_full = jnp.dot(att_ref[...], sT,
                          preferred_element_type=jnp.float32)   # [Hp, Et]
    logits_ref[...] = logits_full
    logits_he = logits_full[:H, :]                        # [H, Et] real heads

    # ---- online (flash-style) segment softmax over destination nodes ----
    m_old = m_scr[...]                                    # [H, N]
    tile_max = jnp.max(jnp.where(coh_b[None, :, :], logits_he[:, None, :], neg),
                       axis=2)                            # [H, N], batched over heads
    m_new = jnp.maximum(m_old, tile_max)
    scale = jnp.exp(m_old - m_new)                        # [H, N]

    # per-edge gather of its destination's running max: one-hot matmul (exactly one nonzero
    # per real edge column; padded/sentinel columns are all-zero -> m_e = 0 there)
    m_e = jnp.dot(m_new, coh_f32, preferred_element_type=jnp.float32)   # [H, Et]
    # real edges always have logit <= m_e; the clamp neutralizes padded edges and any matmul
    # rounding -> do not remove it.
    p = jnp.exp(jnp.minimum(logits_he - m_e, 0.0))        # [H, Et]

    # per-head -> per-channel broadcast via a constant expansion matmul (MXU, no concat loop)
    p_full = jnp.dot(expand_ref[...], p,
                     preferred_element_type=jnp.float32)  # [HC, Et]
    wT = xjT * p_full                                     # weighted messages [HC, Et]

    # scatter-add of numerator and denominator in ONE bf16 MXU matmul (contract over edges)
    rhs_cat = jnp.concatenate([wT, p], axis=0).astype(jnp.bfloat16)     # [HC+H, Et]
    contribT = lax.dot_general(rhs_cat, coh_bf, EDGE_CONTRACT,
                               preferred_element_type=jnp.float32)      # [HC+H, N]
    acc_contrib = contribT[:HC, :]                        # [HC, N]
    l_contrib = contribT[HC:HC + H, :]                    # [H, N]

    scale_full = jnp.dot(expand_ref[...], scale,
                         preferred_element_type=jnp.float32)            # [HC, N]
    acc_scr[...] = acc_scr[...] * scale_full + acc_contrib
    l_scr[...] = l_scr[...] * scale + l_contrib
    m_scr[...] = m_new

    @pl.when(t == nt - 1)
    def _finalize():
        inv_l = 1.0 / (l_scr[...] + 1e-16)                # runs once -> exact divide
        inv_full = jnp.dot(expand_ref[...], inv_l,
                           preferred_element_type=jnp.float32)          # [HC, N]
        normT = acc_scr[...] * inv_full                   # [HC, N]
        # concat=False -> mean over heads via constant [C, HC] summing matrix (pre-scaled
        # by 1/H in the wrapper); avoids strided sublane slices in the finalize.
        outT_ref[...] = jnp.dot(hsum_ref[...], normT,
                                preferred_element_type=jnp.float32).astype(outT_ref.dtype)
        # TODO(synk): F.dropout on attention weights omitted (module default p=0.0 / eval).
        # TODO(synk): concat=True + out_proj and edge-feature (lin_edge) paths not implemented
        #             (module defaults: concat=False, use_edge_features=False).


def _vmem_capacity_bytes():
    try:
        info = pltpu.get_tpu_info()
        for attr in ("vmem_capacity_bytes", "vmem_size_bytes", "vmem_bytes"):
            v = getattr(info, attr, None)
            if v:
                return int(v)
    except Exception:
        pass
    return 64 * 1024 * 1024            # conservative (v7x-sized) fallback


def _pick_edge_tile(N, H, HC, E, budget_bytes):
    """Largest multiple-of-128 edge tile whose per-tile intermediates fit the VMEM budget."""
    # resident: bf16 x_proj^T (double-buffered) + f32 acc/m/l scratch + out buffer
    resident = 2 * HC * N * 2 + HC * N * 4 + 2 * H * N * 4 + HC * N * 4
    # transient bytes per edge of a tile: [N,2Et] masks (bool + bf16), [N,Et] f32 mask,
    # the [H,N,Et] masked-max temp, and ~6 [HC,Et]-sized f32 activation temps.
    per_edge = N * (2 + 4 + 4 + 4 * H) + HC * 4 * 6
    avail = budget_bytes - resident - (4 << 20)
    if avail > 0:
        et = (avail // max(per_edge, 1) // 128) * 128
    else:
        et = 128
    et = max(128, min(1024, et))
    # don't pad tiny graphs up to a huge tile
    et = min(et, max(128, pl.cdiv(E, 128) * 128))
    return int(et)


def gatv2_forward(x, edge_index, w_node, att, *, heads, out_channels, edge_tile=None):
    """x: [N, Fin]; edge_index: [2, E] int; w_node: [H*C, Fin] (torch layout); att: [H, C]."""
    N, Fin = x.shape
    H, C = heads, out_channels
    HC = H * C
    Hp = pl.cdiv(H, 8) * 8                 # pad head dim to 8 sublanes for dense logits stores
    E = edge_index.shape[1]

    budget = int(min(100 * 2**20, 0.75 * _vmem_capacity_bytes()))
    if edge_tile is None:
        edge_tile = _pick_edge_tile(N, H, HC, E, budget)
    T = int(pl.cdiv(E, edge_tile))
    E_pad = T * edge_tile

    # ---- edge indices padded with sentinel N (matches no node -> inert edge) and packed
    # per tile as [col | row] along lanes so a single streamed input feeds both gathers ----
    pad = E_pad - E
    sentinel = jnp.full((pad,), N, dtype=jnp.int32)
    col = jnp.concatenate([edge_index[1].astype(jnp.int32), sentinel])
    row = jnp.concatenate([edge_index[0].astype(jnp.int32), sentinel])
    idx = jnp.stack([col.reshape(T, edge_tile), row.reshape(T, edge_tile)],
                    axis=1).reshape(1, T * 2 * edge_tile)

    # ---- node projection hoisted out of the kernel (bf16 resident operand) ----
    xprojT = (w_node.astype(jnp.float32) @ x.astype(jnp.float32).T).astype(jnp.bfloat16)
    # TODO(synk): for very large N this projection could itself be a tiled pallas matmul.

    # block-diagonal attention vector zero-padded to Hp heads:
    # att_block[h', h*C + c] = att[h, c] * (h == h')
    att_f = att.astype(jnp.float32)
    blk = (jnp.eye(H, dtype=jnp.float32)[:, :, None] * att_f[None, :, :]).reshape(H, HC)
    att_block = jnp.concatenate([blk, jnp.zeros((Hp - H, HC), jnp.float32)], axis=0)

    # tiny constant expansion / head-mean matrices (used as MXU broadcasts inside the kernel)
    hc_ids = jnp.arange(HC, dtype=jnp.int32)
    expand = (hc_ids[:, None] // C == jnp.arange(H, dtype=jnp.int32)[None, :]
              ).astype(jnp.float32)                                   # [HC, H]
    head_mean = ((hc_ids[None, :] % C == jnp.arange(C, dtype=jnp.int32)[:, None])
                 .astype(jnp.float32)) * (1.0 / H)                    # [C, HC]

    grid_spec = pltpu.PrefetchScalarGridSpec(
        num_scalar_prefetch=0,
        grid=(T,),
        in_specs=[
            pl.BlockSpec((HC, N), lambda t: (0, 0)),             # x_proj^T (resident, bf16)
            pl.BlockSpec((Hp, HC), lambda t: (0, 0)),            # attention block (resident)
            pl.BlockSpec((HC, H), lambda t: (0, 0)),             # head->channel expansion
            pl.BlockSpec((C, HC), lambda t: (0, 0)),             # head-mean matrix
            pl.BlockSpec((1, 2 * edge_tile), lambda t: (0, t)),  # packed [col|row] indices
        ],
        out_specs=(
            pl.BlockSpec((C, N), lambda t: (0, 0)),              # out^T: resident accumulator
            pl.BlockSpec((Hp, edge_tile), lambda t: (0, t)),     # logits: lane-dense per tile
        ),
        scratch_shapes=[
            pltpu.VMEM((H, N), jnp.float32),     # running max        m   [H, N]
            pltpu.VMEM((H, N), jnp.float32),     # running denom      l   [H, N]
            pltpu.VMEM((HC, N), jnp.float32),    # running weighted sum   [HC, N]
        ],
    )

    flops = int(T * (2 * HC * N * 2 * edge_tile          # fused endpoint gather
                     + 2 * Hp * HC * edge_tile           # attention logits
                     + 2 * H * N * edge_tile             # m_e gather
                     + 2 * HC * H * edge_tile            # p_full expansion
                     + 2 * (HC + H) * N * edge_tile      # scatter-add
                     + 2 * HC * H * N)                   # scale_full
                + 2 * C * HC * N + 2 * HC * H * N)       # finalize
    transcendentals = int(T * (H * edge_tile + 2 * H * N))
    bytes_accessed = int(2 * HC * N + 4 * (Hp * HC + HC * H + C * HC)
                         + 4 * 2 * E_pad + 4 * C * N + 4 * Hp * E_pad)

    outT, logits_full = pl.pallas_call(
        gatv2_kernel,
        grid_spec=grid_spec,
        out_shape=(
            jax.ShapeDtypeStruct((C, N), jnp.float32),
            jax.ShapeDtypeStruct((Hp, E_pad), jnp.float32),
        ),
        compiler_params=pltpu.CompilerParams(
            dimension_semantics=("arbitrary",),
            vmem_limit_bytes=budget,
        ),
        cost_estimate=pl.CostEstimate(flops=flops, transcendentals=transcendentals,
                                      bytes_accessed=bytes_accessed),
    )(xprojT, att_block, expand, head_mean, idx)
    # TODO(synk): on v7x, add a leading 'parallel' node-block grid axis (edges pre-sorted by
    #             destination) to use both TensorCores; this version runs on a single core.

    out = outT.T                        # [N, C] torch layout
    logits = logits_full[:H, :E].T      # [E, H] torch layout (latest_logits)
    return out, logits


def gatv2_reference(x, edge_index, w_node, att, *, heads, out_channels):
    """Pure-JAX reference mirroring the torch module (concat=False, no edge feats)."""
    N = x.shape[0]
    H, C = heads, out_channels
    x_proj = (x @ w_node.T).reshape(N, H, C)
    row, col = edge_index[0], edge_index[1]
    x_i = x_proj[row]
    x_j = x_proj[col]
    s = x_i + x_j
    s = jnp.where(s > 0, s, 0.2 * s)
    alpha = jnp.sum(s * att[None], axis=-1)                          # [E, H]  (latest_logits)
    seg_max = jax.ops.segment_max(alpha, col, num_segments=N)
    ex = jnp.exp(alpha - seg_max[col])
    denom = jax.ops.segment_sum(ex, col, num_segments=N)[col]
    a = ex / (denom + 1e-16)
    out = jax.ops.segment_sum(x_j * a[..., None], col, num_segments=N)
    return out.mean(axis=1), alpha


def xavier_uniform(key, shape, fan_in, fan_out, dtype=jnp.float32):
    bound = (6.0 / (fan_in + fan_out)) ** 0.5
    return jax.random.uniform(key, shape, dtype=dtype, minval=-bound, maxval=bound)


if __name__ == "__main__":
    # small graph, module-consistent shapes
    N = 32          # num nodes
    E = 300         # num edges
    FIN = 16        # in_channels
    C = 32          # out_channels
    H = 2           # heads (concat=False -> mean over heads)

    key = jax.random.PRNGKey(0)
    k_x, k_e1, k_e2, k_w, k_a = jax.random.split(key, 5)

    x = jax.random.normal(k_x, (N, FIN), dtype=jnp.float32)
    row = jax.random.randint(k_e1, (E,), 0, N)
    col = jax.random.randint(k_e2, (E,), 0, N)
    edge_index = jnp.stack([row, col], axis=0)                 # [2, E]

    # parameters in torch layouts: lin_node.weight [H*C, Fin], att [H, C]
    w_node = xavier_uniform(k_w, (H * C, FIN), fan_in=FIN, fan_out=H * C)
    att = xavier_uniform(k_a, (H, C), fan_in=H, fan_out=C)

    out_ref, logits_ref = gatv2_reference(x, edge_index, w_node, att,
                                          heads=H, out_channels=C)

    # 1) auto-sized (large) edge tile -- single-tile fast path
    out1, lg1 = gatv2_forward(x, edge_index, w_node, att, heads=H, out_channels=C)
    jax.block_until_ready((out1, lg1))
    assert out1.shape == (N, C) and lg1.shape == (E, H)
    # bf16 MXU operands -> slightly looser tolerance than pure-f32
    assert jnp.allclose(out1, out_ref, rtol=2e-2, atol=2e-2)
    assert jnp.allclose(lg1, logits_ref, rtol=2e-2, atol=2e-2)

    # 2) forced small tile -> exercises the multi-tile online-softmax accumulation path
    out2, lg2 = gatv2_forward(x, edge_index, w_node, att, heads=H, out_channels=C,
                              edge_tile=128)
    jax.block_until_ready((out2, lg2))
    assert jnp.allclose(out2, out_ref, rtol=2e-2, atol=2e-2)
    assert jnp.allclose(lg2, logits_ref, rtol=2e-2, atol=2e-2)

    print("KERNEL_OK")
</pallas_src>

<mosaic_0001>
module attributes {stable_mosaic.version = 11 : i64} {
  func.func @gatv2_kernel(%arg0: i32, %arg1: memref<64x32xbf16, #tpu.memory_space<vmem>>, %arg2: memref<8x64xf32, #tpu.memory_space<vmem>>, %arg3: memref<64x2xf32, #tpu.memory_space<vmem>>, %arg4: memref<32x64xf32, #tpu.memory_space<vmem>>, %arg5: memref<1x768xi32, #tpu.memory_space<vmem>>, %arg6: memref<32x32xf32, #tpu.memory_space<vmem>>, %arg7: memref<8x384xf32, #tpu.memory_space<vmem>>, %arg8: memref<2x32xf32, #tpu.memory_space<vmem>>, %arg9: memref<2x32xf32, #tpu.memory_space<vmem>>, %arg10: memref<64x32xf32, #tpu.memory_space<vmem>>) attributes {dimension_semantics = [#tpu.dimension_semantics<arbitrary>], iteration_bounds = array<i64: 1>, scalar_prefetch = 0 : i64, scratch_operands = 3 : i64, tpu.core_type = #tpu.core_type<tc>, window_params = [{pipeline_mode = #tpu.pipeline_mode<synchronous>, transform_indices = @transform_0, window_bounds = array<i64: 64, 32>}, {pipeline_mode = #tpu.pipeline_mode<synchronous>, transform_indices = @transform_1, window_bounds = array<i64: 8, 64>}, {pipeline_mode = #tpu.pipeline_mode<synchronous>, transform_indices = @transform_2, window_bounds = array<i64: 64, 2>}, {pipeline_mode = #tpu.pipeline_mode<synchronous>, transform_indices = @transform_3, window_bounds = array<i64: 32, 64>}, {transform_indices = @transform_4, window_bounds = array<i64: 1, 768>}, {pipeline_mode = #tpu.pipeline_mode<synchronous>, transform_indices = @transform_5, window_bounds = array<i64: 32, 32>}, {transform_indices = @transform_6, window_bounds = array<i64: 8, 384>}]} {
    %c0_i32 = arith.constant 0 : i32
    %0 = arith.cmpi eq, %arg0, %c0_i32 : i32
    %1 = arith.extui %0 : i1 to i32
    %cst = arith.constant -1.000000e+30 : f32
    %c0_i32_0 = arith.constant 0 : i32
    %2 = arith.cmpi ne, %1, %c0_i32_0 : i32
    scf.if %2 {
      %67 = vector.broadcast %cst : f32 to vector<2x32xf32>
      %c0_37 = arith.constant 0 : index
      %c0_38 = arith.constant 0 : index
      %68 = vector.load %arg8[%c0_37, %c0_38] : memref<2x32xf32, #tpu.memory_space<vmem>>, vector<2x32xf32>
      tpu.vector_store %arg8[%c0_37, %c0_38], %67 {strides = array<i32>} : memref<2x32xf32, #tpu.memory_space<vmem>>, vector<2x32xf32>,
      %cst_39 = arith.constant 0.000000e+00 : f32
      %69 = vector.broadcast %cst_39 : f32 to vector<2x32xf32>
      %c0_40 = arith.constant 0 : index
      %c0_41 = arith.constant 0 : index
      %70 = vector.load %arg9[%c0_40, %c0_41] : memref<2x32xf32, #tpu.memory_space<vmem>>, vector<2x32xf32>
      tpu.vector_store %arg9[%c0_40, %c0_41], %69 {strides = array<i32>} : memref<2x32xf32, #tpu.memory_space<vmem>>, vector<2x32xf32>,
      %cst_42 = arith.constant 0.000000e+00 : f32
      %71 = vector.broadcast %cst_42 : f32 to vector<64x32xf32>
      %c0_43 = arith.constant 0 : index
      %c0_44 = arith.constant 0 : index
      %72 = vector.load %arg10[%c0_43, %c0_44] : memref<64x32xf32, #tpu.memory_space<vmem>>, vector<64x32xf32>
      tpu.vector_store %arg10[%c0_43, %c0_44], %71 {strides = array<i32>} : memref<64x32xf32, #tpu.memory_space<vmem>>, vector<64x32xf32>,
    } else {
    }
    %3 = tpu.iota {dimensions = array<i32: 0>} : vector<32x768xi32>
    %c0 = arith.constant 0 : index
    %c0_1 = arith.constant 0 : index
    %4 = vector.load %arg5[%c0, %c0_1] : memref<1x768xi32, #tpu.memory_space<vmem>>, vector<1x768xi32>
    %5 = vector.broadcast %4 : vector<1x768xi32> to vector<32x768xi32>
    %6 = arith.cmpi eq, %3, %5 : vector<32x768xi32>
    %7 = arith.extui %6 : vector<32x768xi1> to vector<32x768xi32>
    %8 = arith.sitofp %7 : vector<32x768xi32> to vector<32x768xf32>
    %9 = arith.truncf %8 : vector<32x768xf32> to vector<32x768xbf16>
    %10 = vector.extract_strided_slice %6 {offsets = [0, 0], sizes = [32, 384], strides = [1, 1]} : vector<32x768xi1> to vector<32x384xi1>
    %11 = vector.extract_strided_slice %9 {offsets = [0, 0], sizes = [32, 384], strides = [1, 1]} : vector<32x768xbf16> to vector<32x384xbf16>
    %12 = arith.extf %11 : vector<32x384xbf16> to vector<32x384xf32>
    %c0_2 = arith.constant 0 : index
    %c0_3 = arith.constant 0 : index
    %13 = vector.load %arg1[%c0_2, %c0_3] : memref<64x32xbf16, #tpu.memory_space<vmem>>, vector<64x32xbf16>
    %cst_4 = arith.constant dense<0.000000e+00> : vector<64x768xf32>
    %14 = tpu.matmul %13, %9, %cst_4 {dimension_numbers = #tpu.dot_dimension_numbers<[1], [0], [0], [1], [0, 0, 1, 1], [], []>} : vector<64x32xbf16>, vector<32x768xbf16>, vector<64x768xf32> -> vector<64x768xf32>
    %15 = vector.extract_strided_slice %14 {offsets = [0, 0], sizes = [64, 384], strides = [1, 1]} : vector<64x768xf32> to vector<64x384xf32>
    %16 = vector.extract_strided_slice %14 {offsets = [0, 384], sizes = [64, 384], strides = [1, 1]} : vector<64x768xf32> to vector<64x384xf32>
    %17 = arith.addf %16, %15 : vector<64x384xf32>
    %cst_5 = arith.constant 0.000000e+00 : f32
    %18 = vector.broadcast %cst_5 : f32 to vector<64x384xf32>
    %19 = arith.cmpf ogt, %17, %18 : vector<64x384xf32>
    %cst_6 = arith.constant 2.000000e-01 : f32
    %20 = vector.broadcast %cst_6 : f32 to vector<64x384xf32>
    %21 = arith.mulf %20, %17 : vector<64x384xf32>
    %22 = arith.select %19, %17, %21 : vector<64x384xi1>, vector<64x384xf32>
    %c0_7 = arith.constant 0 : index
    %c0_8 = arith.constant 0 : index
    %23 = vector.load %arg2[%c0_7, %c0_8] : memref<8x64xf32, #tpu.memory_space<vmem>>, vector<8x64xf32>
    %cst_9 = arith.constant dense<0.000000e+00> : vector<8x384xf32>
    %24 = tpu.matmul %23, %22, %cst_9 {dimension_numbers = #tpu.dot_dimension_numbers<[1], [0], [0], [1], [0, 0, 1, 1], [], []>} : vector<8x64xf32>, vector<64x384xf32>, vector<8x384xf32> -> vector<8x384xf32>
    %c0_10 = arith.constant 0 : index
    %c0_11 = arith.constant 0 : index
    %25 = vector.load %arg7[%c0_10, %c0_11] : memref<8x384xf32, #tpu.memory_space<vmem>>, vector<8x384xf32>
    tpu.vector_store %arg7[%c0_10, %c0_11], %24 {strides = array<i32>} : memref<8x384xf32, #tpu.memory_space<vmem>>, vector<8x384xf32>,
    %26 = vector.extract_strided_slice %24 {offsets = [0, 0], sizes = [2, 384], strides = [1, 1]} : vector<8x384xf32> to vector<2x384xf32>
    %c0_12 = arith.constant 0 : index
    %c0_13 = arith.constant 0 : index
    %27 = vector.load %arg8[%c0_12, %c0_13] : memref<2x32xf32, #tpu.memory_space<vmem>>, vector<2x32xf32>
    %28 = vector.shape_cast %10 : vector<32x384xi1> to vector<1x32x384xi1>
    %29 = vector.shape_cast %26 : vector<2x384xf32> to vector<2x1x384xf32>
    %cst_14 = arith.constant -1.000000e+30 : f32
    %30 = vector.shape_cast %28 : vector<1x32x384xi1> to vector<1x32x384xi1>
    %31 = vector.broadcast %30 : vector<1x32x384xi1> to vector<2x32x384xi1>
    %32 = vector.shape_cast %29 : vector<2x1x384xf32> to vector<2x1x384xf32>
    %33 = vector.broadcast %32 : vector<2x1x384xf32> to vector<2x32x384xf32>
    %34 = vector.broadcast %cst_14 : f32 to vector<2x32x384xf32>
    %35 = arith.select %31, %33, %34 : vector<2x32x384xi1>, vector<2x32x384xf32>
    %cst_15 = arith.constant dense<0xFF800000> : vector<2x32xf32>
    %36 = vector.multi_reduction <maximumf>, %35, %cst_15 [2] : vector<2x32x384xf32> to vector<2x32xf32>
    %37 = arith.maximumf %27, %36 : vector<2x32xf32>
    %38 = arith.subf %27, %37 : vector<2x32xf32>
    %39 = math.exp %38 : vector<2x32xf32>
    %cst_16 = arith.constant dense<0.000000e+00> : vector<2x384xf32>
    %40 = tpu.matmul %37, %12, %cst_16 {dimension_numbers = #tpu.dot_dimension_numbers<[1], [0], [0], [1], [0, 0, 1, 1], [], []>} : vector<2x32xf32>, vector<32x384xf32>, vector<2x384xf32> -> vector<2x384xf32>
    %41 = arith.subf %26, %40 : vector<2x384xf32>
    %cst_17 = arith.constant 0.000000e+00 : f32
    %42 = vector.broadcast %cst_17 : f32 to vector<2x384xf32>
    %43 = arith.minimumf %41, %42 : vector<2x384xf32>
    %44 = math.exp %43 : vector<2x384xf32>
    %c0_18 = arith.constant 0 : index
    %c0_19 = arith.constant 0 : index
    %45 = vector.load %arg3[%c0_18, %c0_19] : memref<64x2xf32, #tpu.memory_space<vmem>>, vector<64x2xf32>
    %cst_20 = arith.constant dense<0.000000e+00> : vector<64x384xf32>
    %46 = tpu.matmul %45, %44, %cst_20 {dimension_numbers = #tpu.dot_dimension_numbers<[1], [0], [0], [1], [0, 0, 1, 1], [], []>} : vector<64x2xf32>, vector<2x384xf32>, vector<64x384xf32> -> vector<64x384xf32>
    %47 = arith.mulf %15, %46 : vector<64x384xf32>
    %48 = tpu.concatenate %47, %44 in 0 : vector<64x384xf32>, vector<2x384xf32> -> vector<66x384xf32>
    %49 = arith.truncf %48 : vector<66x384xf32> to vector<66x384xbf16>
    %cst_21 = arith.constant dense<0.000000e+00> : vector<66x32xf32>
    %50 = tpu.matmul %49, %11, %cst_21 {dimension_numbers = #tpu.dot_dimension_numbers<[1], [1], [0], [0], [0, 0, 1, 0], [], []>} : vector<66x384xbf16>, vector<32x384xbf16>, vector<66x32xf32> -> vector<66x32xf32>
    %51 = vector.extract_strided_slice %50 {offsets = [0, 0], sizes = [64, 32], strides = [1, 1]} : vector<66x32xf32> to vector<64x32xf32>
    %52 = vector.extract_strided_slice %50 {offsets = [64, 0], sizes = [2, 32], strides = [1, 1]} : vector<66x32xf32> to vector<2x32xf32>
    %c0_22 = arith.constant 0 : index
    %c0_23 = arith.constant 0 : index
    %53 = vector.load %arg3[%c0_22, %c0_23] : memref<64x2xf32, #tpu.memory_space<vmem>>, vector<64x2xf32>
    %cst_24 = arith.constant dense<0.000000e+00> : vector<64x32xf32>
    %54 = tpu.matmul %53, %39, %cst_24 {dimension_numbers = #tpu.dot_dimension_numbers<[1], [0], [0], [1], [0, 0, 1, 1], [], []>} : vector<64x2xf32>, vector<2x32xf32>, vector<64x32xf32> -> vector<64x32xf32>
    %c0_25 = arith.constant 0 : index
    %c0_26 = arith.constant 0 : index
    %55 = vector.load %arg10[%c0_25, %c0_26] : memref<64x32xf32, #tpu.memory_space<vmem>>, vector<64x32xf32>
    %56 = arith.mulf %55, %54 : vector<64x32xf32>
    %57 = arith.addf %56, %51 : vector<64x32xf32>
    %c0_27 = arith.constant 0 : index
    %c0_28 = arith.constant 0 : index
    %58 = vector.load %arg10[%c0_27, %c0_28] : memref<64x32xf32, #tpu.memory_space<vmem>>, vector<64x32xf32>
    tpu.vector_store %arg10[%c0_27, %c0_28], %57 {strides = array<i32>} : memref<64x32xf32, #tpu.memory_space<vmem>>, vector<64x32xf32>,
    %c0_29 = arith.constant 0 : index
    %c0_30 = arith.constant 0 : index
    %59 = vector.load %arg9[%c0_29, %c0_30] : memref<2x32xf32, #tpu.memory_space<vmem>>, vector<2x32xf32>
    %60 = arith.mulf %59, %39 : vector<2x32xf32>
    %61 = arith.addf %60, %52 : vector<2x32xf32>
    %c0_31 = arith.constant 0 : index
    %c0_32 = arith.constant 0 : index
    %62 = vector.load %arg9[%c0_31, %c0_32] : memref<2x32xf32, #tpu.memory_space<vmem>>, vector<2x32xf32>
    tpu.vector_store %arg9[%c0_31, %c0_32], %61 {strides = array<i32>} : memref<2x32xf32, #tpu.memory_space<vmem>>, vector<2x32xf32>,
    %c0_33 = arith.constant 0 : index
    %c0_34 = arith.constant 0 : index
    %63 = vector.load %arg8[%c0_33, %c0_34] : memref<2x32xf32, #tpu.memory_space<vmem>>, vector<2x32xf32>
    tpu.vector_store %arg8[%c0_33, %c0_34], %37 {strides = array<i32>} : memref<2x32xf32, #tpu.memory_space<vmem>>, vector<2x32xf32>,
    %c0_i32_35 = arith.constant 0 : i32
    %64 = arith.cmpi eq, %arg0, %c0_i32_35 : i32
    %65 = arith.extui %64 : i1 to i32
    %c0_i32_36 = arith.constant 0 : i32
    %66 = arith.cmpi ne, %65, %c0_i32_36 : i32
    scf.if %66 {
      %c0_37 = arith.constant 0 : index
      %c0_38 = arith.constant 0 : index
      %67 = vector.load %arg9[%c0_37, %c0_38] : memref<2x32xf32, #tpu.memory_space<vmem>>, vector<2x32xf32>
      %cst_39 = arith.constant 1.000000e-16 : f32
      %68 = vector.broadcast %cst_39 : f32 to vector<2x32xf32>
      %69 = arith.addf %67, %68 : vector<2x32xf32>
      %cst_40 = arith.constant 1.000000e+00 : f32
      %70 = vector.broadcast %cst_40 : f32 to vector<2x32xf32>
      %71 = arith.divf %70, %69 : vector<2x32xf32>
      %c0_41 = arith.constant 0 : index
      %c0_42 = arith.constant 0 : index
      %72 = vector.load %arg3[%c0_41, %c0_42] : memref<64x2xf32, #tpu.memory_space<vmem>>, vector<64x2xf32>
      %cst_43 = arith.constant dense<0.000000e+00> : vector<64x32xf32>
      %73 = tpu.matmul %72, %71, %cst_43 {dimension_numbers = #tpu.dot_dimension_numbers<[1], [0], [0], [1], [0, 0, 1, 1], [], []>} : vector<64x2xf32>, vector<2x32xf32>, vector<64x32xf32> -> vector<64x32xf32>
      %c0_44 = arith.constant 0 : index
      %c0_45 = arith.constant 0 : index
      %74 = vector.load %arg10[%c0_44, %c0_45] : memref<64x32xf32, #tpu.memory_space<vmem>>, vector<64x32xf32>
      %75 = arith.mulf %74, %73 : vector<64x32xf32>
      %c0_46 = arith.constant 0 : index
      %c0_47 = arith.constant 0 : index
      %76 = vector.load %arg4[%c0_46, %c0_47] : memref<32x64xf32, #tpu.memory_space<vmem>>, vector<32x64xf32>
      %cst_48 = arith.constant dense<0.000000e+00> : vector<32x32xf32>
      %77 = tpu.matmul %76, %75, %cst_48 {dimension_numbers = #tpu.dot_dimension_numbers<[1], [0], [0], [1], [0, 0, 1, 1], [], []>} : vector<32x64xf32>, vector<64x32xf32>, vector<32x32xf32> -> vector<32x32xf32>
      %c0_49 = arith.constant 0 : index
      %c0_50 = arith.constant 0 : index
      %78 = vector.load %arg6[%c0_49, %c0_50] : memref<32x32xf32, #tpu.memory_space<vmem>>, vector<32x32xf32>
      tpu.vector_store %arg6[%c0_49, %c0_50], %77 {strides = array<i32>} : memref<32x32xf32, #tpu.memory_space<vmem>>, vector<32x32xf32>,
    } else {
    }
    return
  }
  func.func @transform_0(%arg0: i32) -> (i32, i32) {
    %c0_i32 = arith.constant 0 : i32
    %c0_i32_0 = arith.constant 0 : i32
    %c0_i32_1 = arith.constant 0 : i32
    return %c0_i32, %c0_i32_0 : i32, i32
  }
  func.func @transform_1(%arg0: i32) -> (i32, i32) {
    %c0_i32 = arith.constant 0 : i32
    %c0_i32_0 = arith.constant 0 : i32
    %c0_i32_1 = arith.constant 0 : i32
    return %c0_i32, %c0_i32_0 : i32, i32
  }
  func.func @transform_2(%arg0: i32) -> (i32, i32) {
    %c0_i32 = arith.constant 0 : i32
    %c0_i32_0 = arith.constant 0 : i32
    %c0_i32_1 = arith.constant 0 : i32
    return %c0_i32, %c0_i32_0 : i32, i32
  }
  func.func @transform_3(%arg0: i32) -> (i32, i32) {
    %c0_i32 = arith.constant 0 : i32
    %c0_i32_0 = arith.constant 0 : i32
    %c0_i32_1 = arith.constant 0 : i32
    return %c0_i32, %c0_i32_0 : i32, i32
  }
  func.func @transform_4(%arg0: i32) -> (i32, i32) {
    %c0_i32 = arith.constant 0 : i32
    %c0_i32_0 = arith.constant 0 : i32
    return %c0_i32, %arg0 : i32, i32
  }
  func.func @transform_5(%arg0: i32) -> (i32, i32) {
    %c0_i32 = arith.constant 0 : i32
    %c0_i32_0 = arith.constant 0 : i32
    %c0_i32_1 = arith.constant 0 : i32
    return %c0_i32, %c0_i32_0 : i32, i32
  }
  func.func @transform_6(%arg0: i32) -> (i32, i32) {
    %c0_i32 = arith.constant 0 : i32
    %c0_i32_0 = arith.constant 0 : i32
    return %c0_i32, %arg0 : i32, i32
  }
}

</mosaic_0001>

<llo_original>
// kernel: tpu_custom_call.1
$region0: #{tpu_custom_call.1}
  #allocation0 [shape = 'u32[]', space=smem, size = 0x4, offset = 0x4, fixed_abs, tag = 'smem constant byte address 0x4 - core index']
  #allocation1 [shape = 'u32[72,128]{1,0:T(1,128)}', space=vmem, size = 0x9000, scoped, tag = 'internal scratch']
  #allocation2 [shape = 'f32[2,32]{1,0:T(2,128)}', space=vmem, size = 0x400, scoped, tag = 'scratch operand']
  #allocation3 [shape = 'f32[2,32]{1,0:T(2,128)}', space=vmem, size = 0x400, scoped, tag = 'scratch operand']
  #allocation4 [shape = 'f32[64,32]{1,0:T(8,128)}', space=vmem, size = 0x8000, scoped, tag = 'scratch operand']
  %s0 = inlined_call_operand.vmem [shape: bf16[64,32], index: 0, kind: input, shape index: {}]
  %s1 = inlined_call_operand.vmem [shape: f32[8,64], index: 1, kind: input, shape index: {}]
  %s2 = inlined_call_operand.vmem [shape: f32[64,2], index: 2, kind: input, shape index: {}]
  %s3 = inlined_call_operand.vmem [shape: f32[32,64], index: 3, kind: input, shape index: {}]
  %s4 = inlined_call_operand.vmem [shape: s32[1,768], index: 4, kind: input, shape index: {}]
  %s5 = inlined_call_operand.hbm [shape: f32[32,32], index: 5, kind: output, shape index: {0}]
  %s6 = inlined_call_operand.hbm [shape: f32[8,384], index: 6, kind: output, shape index: {1}]
  %7 = xla_tuple %s5, %s6
  %s8 = sld [smem:[#allocation0]]
  $region46: #{tpu_custom_call.1} parent=0
    _
  %s10 = ssub.s32 1, %s8
  %s11 = scalar_select 0, %s10, %s8
  $region1: #{tpu_custom_call.1} parent=0
    #allocation5 [shape = 'u8[16384]{0}', space=vmem, size = 0x4000, scoped, tag = 'output window, operand 0, single buffered']
    #allocation6 [shape = 's32[1]{0}', space=sflag, size = 0x4, scoped, tag = 'scoped memory for tpu_custom_call.1']
    #allocation7 [shape = 'u8[12288]{0}', space=vmem, size = 0x3000, scoped, tag = 'output window, operand 1, single buffered']
    #allocation8 [shape = 's32[1]{0}', space=sflag, size = 0x4, scoped, tag = 'scoped memory for tpu_custom_call.1']
    %12 = vsyncpa [#allocation6], 0
    %13 = vsyncpa [#allocation8], 0
    // Predicated region
    $region2: #{tpu_custom_call.1} parent=1 // pred_check
      _
    $region3: #{tpu_custom_call.1} parent=1 // pred_check_branch
      %15 = sbr.rel (0) target = $region5
    $region4: #{tpu_custom_call.1} parent=1 // pred_region
      _
    $region5: #{tpu_custom_call.1} parent=1 // pred_fallthru
      _
    // Predicated region
    $region6: #{tpu_custom_call.1} parent=1 // pred_check
      _
    $region7: #{tpu_custom_call.1} parent=1 // pred_check_branch
      %17 = sbr.rel (0) target = $region9
    $region8: #{tpu_custom_call.1} parent=1 // pred_region
      _
    $region9: #{tpu_custom_call.1} parent=1 // pred_fallthru
      _
    // Predicated region
    $region10: #{tpu_custom_call.1} parent=1 // pred_check
      _
    $region11: #{tpu_custom_call.1} parent=1 // pred_check_branch
      %19 = sbr.rel (0) target = $region13
    $region12: #{tpu_custom_call.1} parent=1 // pred_region
      _
    $region13: #{tpu_custom_call.1} parent=1 // pred_fallthru
      _
    // Predicated region
    $region14: #{tpu_custom_call.1} parent=1 // pred_check
      _
    $region15: #{tpu_custom_call.1} parent=1 // pred_check_branch
      %21 = sbr.rel (0) target = $region17
    $region16: #{tpu_custom_call.1} parent=1 // pred_region
      _
    $region17: #{tpu_custom_call.1} parent=1 // pred_fallthru
      _
    // Predicated region
    $region18: #{tpu_custom_call.1} parent=1 // pred_check
      _
    $region19: #{tpu_custom_call.1} parent=1 // pred_check_branch
      %23 = sbr.rel (0) target = $region21
    $region20: #{tpu_custom_call.1} parent=1 // pred_region
      _
    $region21: #{tpu_custom_call.1} parent=1 // pred_fallthru
      _
    %p25 = scmp.eq.s32.totalorder 0, 0
    // Predicated region
    $region22: #{tpu_custom_call.1} parent=1 // pred_check
      %p26 = pneg %p25
    $region23: #{tpu_custom_call.1} parent=1 // pred_check_branch
      %28 = sbr.rel (%p26) target = $region25
    $region24: #{tpu_custom_call.1} parent=1 // pred_region
      %vm29 = vcmask 254976
      %30 = vst.msk [vmem:[#allocation2] sm:$0x3] %vm29, -1e+30
      %31 = vst.msk [vmem:[#allocation3] sm:$0x3] %vm29, 0.0
      %vm32 = vcmask 261120
      %33 = vst.msk [vmem:[#allocation4] sm:$0xff] %vm32, 0.0
      %34 = vst.msk [vmem:[#allocation4 + $0x8] sm:$0xff] %vm32, 0.0
      %35 = vst.msk [vmem:[#allocation4 + $0x10] sm:$0xff] %vm32, 0.0
      %36 = vst.msk [vmem:[#allocation4 + $0x18] sm:$0xff] %vm32, 0.0
      %37 = vst.msk [vmem:[#allocation4 + $0x20] sm:$0xff] %vm32, 0.0
      %38 = vst.msk [vmem:[#allocation4 + $0x28] sm:$0xff] %vm32, 0.0
      %39 = vst.msk [vmem:[#allocation4 + $0x30] sm:$0xff] %vm32, 0.0
      %40 = vst.msk [vmem:[#allocation4 + $0x38] sm:$0xff] %vm32, 0.0
    $region25: #{tpu_custom_call.1} parent=1 // pred_fallthru
      _
    %v41 = vlaneseq
    %v42 = vshrl.u32 %v41, 7
    %v43 = vadd.s32 %v42, 8
    %v44 = vadd.s32 %v42, 16
    %v45 = vadd.s32 %v42, 24
    %v46 = vld [vmem:[%s4] sm:$0x3f]
    %v47 = vperm.slane %v46, 0
    %v48 = vperm.slane %v46, 1
    %v49 = vperm.slane %v46, 2
    %v50 = vperm.slane %v46, 3
    %v51 = vperm.slane %v46, 4
    %v52 = vperm.slane %v46, 5
    %vm53 = vcmp.eq.s32.totalorder %v42, %v47
    %vm54 = vcmp.eq.s32.totalorder %v42, %v48
    %vm55 = vcmp.eq.s32.totalorder %v42, %v49
    %vm56 = vcmp.eq.s32.totalorder %v42, %v50
    %vm57 = vcmp.eq.s32.totalorder %v42, %v51
    %vm58 = vcmp.eq.s32.totalorder %v42, %v52
    %vm59 = vcmp.eq.s32.totalorder %v43, %v47
    %vm60 = vcmp.eq.s32.totalorder %v43, %v48
    %vm61 = vcmp.eq.s32.totalorder %v43, %v49
    %vm62 = vcmp.eq.s32.totalorder %v43, %v50
    %vm63 = vcmp.eq.s32.totalorder %v43, %v51
    %vm64 = vcmp.eq.s32.totalorder %v43, %v52
    %vm65 = vcmp.eq.s32.totalorder %v44, %v47
    %vm66 = vcmp.eq.s32.totalorder %v44, %v48
    %vm67 = vcmp.eq.s32.totalorder %v44, %v49
    %vm68 = vcmp.eq.s32.totalorder %v44, %v50
    %vm69 = vcmp.eq.s32.totalorder %v44, %v51
    %vm70 = vcmp.eq.s32.totalorder %v44, %v52
    %vm71 = vcmp.eq.s32.totalorder %v45, %v47
    %vm72 = vcmp.eq.s32.totalorder %v45, %v48
    %vm73 = vcmp.eq.s32.totalorder %v45, %v49
    %vm74 = vcmp.eq.s32.totalorder %v45, %v50
    %vm75 = vcmp.eq.s32.totalorder %v45, %v51
    %vm76 = vcmp.eq.s32.totalorder %v45, %v52
    %v77 = vsel %vm53, 1, 0
    %v78 = vsel %vm54, 1, 0
    %v79 = vsel %vm55, 1, 0
    %v80 = vsel %vm56, 1, 0
    %v81 = vsel %vm57, 1, 0
    %v82 = vsel %vm58, 1, 0
    %v83 = vsel %vm59, 1, 0
    %v84 = vsel %vm60, 1, 0
    %v85 = vsel %vm61, 1, 0
    %v86 = vsel %vm62, 1, 0
    %v87 = vsel %vm63, 1, 0
    %v88 = vsel %vm64, 1, 0
    %v89 = vsel %vm65, 1, 0
    %v90 = vsel %vm66, 1, 0
    %v91 = vsel %vm67, 1, 0
    %v92 = vsel %vm68, 1, 0
    %v93 = vsel %vm69, 1, 0
    %v94 = vsel %vm70, 1, 0
    %v95 = vsel %vm71, 1, 0
    %v96 = vsel %vm72, 1, 0
    %v97 = vsel %vm73, 1, 0
    %v98 = vsel %vm74, 1, 0
    %v99 = vsel %vm75, 1, 0
    %v100 = vsel %vm76, 1, 0
    %v101 = vcvt.s32.f32 %v77
    %v102 = vcvt.s32.f32 %v78
    %v103 = vcvt.s32.f32 %v79
    %v104 = vcvt.s32.f32 %v80
    %v105 = vcvt.s32.f32 %v81
    %v106 = vcvt.s32.f32 %v82
    %v107 = vcvt.s32.f32 %v83
    %v108 = vcvt.s32.f32 %v84
    %v109 = vcvt.s32.f32 %v85
    %v110 = vcvt.s32.f32 %v86
    %v111 = vcvt.s32.f32 %v87
    %v112 = vcvt.s32.f32 %v88
    %v113 = vcvt.s32.f32 %v89
    %v114 = vcvt.s32.f32 %v90
    %v115 = vcvt.s32.f32 %v91
    %v116 = vcvt.s32.f32 %v92
    %v117 = vcvt.s32.f32 %v93
    %v118 = vcvt.s32.f32 %v94
    %v119 = vcvt.s32.f32 %v95
    %v120 = vcvt.s32.f32 %v96
    %v121 = vcvt.s32.f32 %v97
    %v122 = vcvt.s32.f32 %v98
    %v123 = vcvt.s32.f32 %v99
    %v124 = vcvt.s32.f32 %v100
    %v125 = vpack.c.bf16 %v102, %v101
    %v126 = vpack.c.bf16 %v104, %v103
    %v127 = vpack.c.bf16 %v106, %v105
    %v128 = vpack.c.bf16 %v108, %v107
    %v129 = vpack.c.bf16 %v110, %v109
    %v130 = vpack.c.bf16 %v112, %v111
    %v131 = vpack.c.bf16 %v114, %v113
    %v132 = vpack.c.bf16 %v116, %v115
    %v133 = vpack.c.bf16 %v118, %v117
    %v134 = vpack.c.bf16 %v120, %v119
    %v135 = vpack.c.bf16 %v122, %v121
    %v136 = vpack.c.bf16 %v124, %v123
    %v137 = vunpack.c.l.bf16 %v125
    %v138 = vunpack.c.h.bf16 %v125
    %v139 = vunpack.c.l.bf16 %v126
    %v140 = vunpack.c.l.bf16 %v128
    %v141 = vunpack.c.h.bf16 %v128
    %v142 = vunpack.c.l.bf16 %v129
    %v143 = vunpack.c.l.bf16 %v131
    %v144 = vunpack.c.h.bf16 %v131
    %v145 = vunpack.c.l.bf16 %v132
    %v146 = vunpack.c.l.bf16 %v134
    %v147 = vunpack.c.h.bf16 %v134
    %v148 = vunpack.c.l.bf16 %v135
    %v149 = vld [vmem:[%s0] sm:$0xf]
    %v150 = vld [vmem:[%s0 + $0x4] sm:$0xf]
    %v151 = vld [vmem:[%s0 + $0x8] sm:$0xf]
    %v152 = vld [vmem:[%s0 + $0xc] sm:$0xf]
    %v153 = vld [vmem:[%s0 + $0x10] sm:$0xf]
    %v154 = vld [vmem:[%s0 + $0x14] sm:$0xf]
    %v155 = vld [vmem:[%s0 + $0x18] sm:$0xf]
    %v156 = vld [vmem:[%s0 + $0x1c] sm:$0xf]
    %v165 = vunpack.c.l.b16 %v149
    %v166 = vunpack.c.l.b16 %v150
    %v167 = vunpack.c.l.b16 %v151
    %v168 = vunpack.c.l.b16 %v152
    %v169 = vunpack.c.l.b16 %v153
    %v170 = vunpack.c.l.b16 %v154
    %v171 = vunpack.c.l.b16 %v155
    %v172 = vunpack.c.l.b16 %v156
    %v173 = vpack.c.b16 %v166, %v165
    %v174 = vpack.c.b16 %v168, %v167
    %v175 = vpack.c.b16 %v170, %v169
    %v176 = vpack.c.b16 %v172, %v171
    %v189 = vunpack.c.l.b16 %v125
    %v190 = vunpack.c.h.b16 %v125
    %v191 = vunpack.c.l.b16 %v126
    %v192 = vunpack.c.h.b16 %v126
    %v193 = vunpack.c.l.b16 %v127
    %v194 = vunpack.c.h.b16 %v127
    %v195 = vunpack.c.l.b16 %v128
    %v196 = vunpack.c.h.b16 %v128
    %v197 = vunpack.c.l.b16 %v129
    %v198 = vunpack.c.h.b16 %v129
    %v199 = vunpack.c.l.b16 %v130
    %v200 = vunpack.c.h.b16 %v130
    %v201 = vunpack.c.l.b16 %v131
    %v202 = vunpack.c.h.b16 %v131
    %v203 = vunpack.c.l.b16 %v132
    %v204 = vunpack.c.h.b16 %v132
    %v205 = vunpack.c.l.b16 %v133
    %v206 = vunpack.c.h.b16 %v133
    %v207 = vunpack.c.l.b16 %v134
    %v208 = vunpack.c.h.b16 %v134
    %v209 = vunpack.c.l.b16 %v135
    %v210 = vunpack.c.h.b16 %v135
    %v211 = vunpack.c.l.b16 %v136
    %v212 = vunpack.c.h.b16 %v136
    %v213 = vpack.c.b16 %v195, %v189
    %v214 = vpack.c.b16 %v196, %v190
    %v215 = vpack.c.b16 %v197, %v191
    %v216 = vpack.c.b16 %v198, %v192
    %v217 = vpack.c.b16 %v199, %v193
    %v218 = vpack.c.b16 %v200, %v194
    %v219 = vpack.c.b16 %v207, %v201
    %v220 = vpack.c.b16 %v208, %v202
    %v221 = vpack.c.b16 %v209, %v203
    %v222 = vpack.c.b16 %v210, %v204
    %v223 = vpack.c.b16 %v211, %v205
    %v224 = vpack.c.b16 %v212, %v206
    %vm237 = vcmask 261120
    %v239 = vsel %vm237, %v173, 0
    %v242 = vsel %vm237, %v174, 0
    %v245 = vsel %vm237, %v175, 0
    %v248 = vsel %vm237, %v176, 0
    %250 = vmatpush.bf16.msra.mxu0 0
    %251 = vmatpush.bf16.msra.mxu0 0
    %252 = vmatpush.bf16.msra.mxu0 0
    %253 = vmatpush.bf16.msra.mxu0 0
    %254 = vmatpush.bf16.msra.mxu0 0
    %255 = vmatpush.bf16.msra.mxu0 0
    %256 = vmatpush.bf16.msra.mxu0 %v219
    %257 = vmatpush.bf16.msra.mxu0 %v213
    %258 = vmatmul.bf16.gmra.mxu0 %v239
    %v259 = vpop.f32.mrf.mxu0
    %v260 = vadd.f32 0.0, %v259
    %v261 = vpop.f32.mrf.mxu0
    %v262 = vadd.f32 0.0, %v261
    %263 = vmatmul.bf16.gmra.mxu0 %v242
    %v264 = vpop.f32.mrf.mxu0
    %v265 = vadd.f32 0.0, %v264
    %v266 = vpop.f32.mrf.mxu0
    %v267 = vadd.f32 0.0, %v266
    %268 = vmatmul.bf16.gmra.mxu0 %v245
    %v269 = vpop.f32.mrf.mxu0
    %v270 = vadd.f32 0.0, %v269
    %v271 = vpop.f32.mrf.mxu0
    %v272 = vadd.f32 0.0, %v271
    %273 = vmatmul.bf16.gmra.mxu0 %v248
    %v274 = vpop.f32.mrf.mxu0
    %v275 = vadd.f32 0.0, %v274
    %v276 = vpop.f32.mrf.mxu0
    %v277 = vadd.f32 0.0, %v276
    %278 = vdwg.mxu0
    %279 = vmatpush.bf16.msra.mxu0 0
    %280 = vmatpush.bf16.msra.mxu0 0
    %281 = vmatpush.bf16.msra.mxu0 0
    %282 = vmatpush.bf16.msra.mxu0 0
    %283 = vmatpush.bf16.msra.mxu0 0
    %284 = vmatpush.bf16.msra.mxu0 0
    %285 = vmatpush.bf16.msra.mxu0 %v220
    %286 = vmatpush.bf16.msra.mxu0 %v214
    %287 = vmatmul.bf16.gmra.mxu0 %v239
    %v288 = vpop.f32.mrf.mxu0
    %v289 = vadd.f32 0.0, %v288
    %v290 = vpop.f32.mrf.mxu0
    %v291 = vadd.f32 0.0, %v290
    %292 = vmatmul.bf16.gmra.mxu0 %v242
    %v293 = vpop.f32.mrf.mxu0
    %v294 = vadd.f32 0.0, %v293
    %v295 = vpop.f32.mrf.mxu0
    %v296 = vadd.f32 0.0, %v295
    %297 = vmatmul.bf16.gmra.mxu0 %v245
    %v298 = vpop.f32.mrf.mxu0
    %v299 = vadd.f32 0.0, %v298
    %v300 = vpop.f32.mrf.mxu0
    %v301 = vadd.f32 0.0, %v300
    %302 = vmatmul.bf16.gmra.mxu0 %v248
    %v303 = vpop.f32.mrf.mxu0
    %v304 = vadd.f32 0.0, %v303
    %v305 = vpop.f32.mrf.mxu0
    %v306 = vadd.f32 0.0, %v305
    %307 = vdwg.mxu0
    %308 = vmatpush.bf16.msra.mxu0 0
    %309 = vmatpush.bf16.msra.mxu0 0
    %310 = vmatpush.bf16.msra.mxu0 0
    %311 = vmatpush.bf16.msra.mxu0 0
    %312 = vmatpush.bf16.msra.mxu0 0
    %313 = vmatpush.bf16.msra.mxu0 0
    %314 = vmatpush.bf16.msra.mxu0 %v221
    %315 = vmatpush.bf16.msra.mxu0 %v215
    %316 = vmatmul.bf16.gmra.mxu0 %v239
    %v317 = vpop.f32.mrf.mxu0
    %v318 = vadd.f32 0.0, %v317
    %v319 = vpop.f32.mrf.mxu0
    %v320 = vadd.f32 0.0, %v319
    %321 = vmatmul.bf16.gmra.mxu0 %v242
    %v322 = vpop.f32.mrf.mxu0
    %v323 = vadd.f32 0.0, %v322
    %v324 = vpop.f32.mrf.mxu0
    %v325 = vadd.f32 0.0, %v324
    %326 = vmatmul.bf16.gmra.mxu0 %v245
    %v327 = vpop.f32.mrf.mxu0
    %v328 = vadd.f32 0.0, %v327
    %v329 = vpop.f32.mrf.mxu0
    %v330 = vadd.f32 0.0, %v329
    %331 = vmatmul.bf16.gmra.mxu0 %v248
    %v332 = vpop.f32.mrf.mxu0
    %v333 = vadd.f32 0.0, %v332
    %v334 = vpop.f32.mrf.mxu0
    %v335 = vadd.f32 0.0, %v334
    %336 = vdwg.mxu0
    %337 = vmatpush.bf16.msra.mxu0 0
    %338 = vmatpush.bf16.msra.mxu0 0
    %339 = vmatpush.bf16.msra.mxu0 0
    %340 = vmatpush.bf16.msra.mxu0 0
    %341 = vmatpush.bf16.msra.mxu0 0
    %342 = vmatpush.bf16.msra.mxu0 0
    %343 = vmatpush.bf16.msra.mxu0 %v222
    %344 = vmatpush.bf16.msra.mxu0 %v216
    %345 = vmatmul.bf16.gmra.mxu0 %v239
    %v346 = vpop.f32.mrf.mxu0
    %v347 = vadd.f32 0.0, %v346
    %v348 = vpop.f32.mrf.mxu0
    %v349 = vadd.f32 0.0, %v348
    %350 = vmatmul.bf16.gmra.mxu0 %v242
    %v351 = vpop.f32.mrf.mxu0
    %v352 = vadd.f32 0.0, %v351
    %v353 = vpop.f32.mrf.mxu0
    %v354 = vadd.f32 0.0, %v353
    %355 = vmatmul.bf16.gmra.mxu0 %v245
    %v356 = vpop.f32.mrf.mxu0
    %v357 = vadd.f32 0.0, %v356
    %v358 = vpop.f32.mrf.mxu0
    %v359 = vadd.f32 0.0, %v358
    %360 = vmatmul.bf16.gmra.mxu0 %v248
    %v361 = vpop.f32.mrf.mxu0
    %v362 = vadd.f32 0.0, %v361
    %v363 = vpop.f32.mrf.mxu0
    %v364 = vadd.f32 0.0, %v363
    %365 = vdwg.mxu0
    %366 = vmatpush.bf16.msra.mxu0 0
    %367 = vmatpush.bf16.msra.mxu0 0
    %368 = vmatpush.bf16.msra.mxu0 0
    %369 = vmatpush.bf16.msra.mxu0 0
    %370 = vmatpush.bf16.msra.mxu0 0
    %371 = vmatpush.bf16.msra.mxu0 0
    %372 = vmatpush.bf16.msra.mxu0 %v223
    %373 = vmatpush.bf16.msra.mxu0 %v217
    %374 = vmatmul.bf16.gmra.mxu0 %v239
    %v375 = vpop.f32.mrf.mxu0
    %v376 = vadd.f32 0.0, %v375
    %v377 = vpop.f32.mrf.mxu0
    %v378 = vadd.f32 0.0, %v377
    %379 = vmatmul.bf16.gmra.mxu0 %v242
    %v380 = vpop.f32.mrf.mxu0
    %v381 = vadd.f32 0.0, %v380
    %v382 = vpop.f32.mrf.mxu0
    %v383 = vadd.f32 0.0, %v382
    %384 = vmatmul.bf16.gmra.mxu0 %v245
    %v385 = vpop.f32.mrf.mxu0
    %v386 = vadd.f32 0.0, %v385
    %v387 = vpop.f32.mrf.mxu0
    %v388 = vadd.f32 0.0, %v387
    %389 = vmatmul.bf16.gmra.mxu0 %v248
    %v390 = vpop.f32.mrf.mxu0
    %v391 = vadd.f32 0.0, %v390
    %v392 = vpop.f32.mrf.mxu0
    %v393 = vadd.f32 0.0, %v392
    %394 = vdwg.mxu0
    %395 = vmatpush.bf16.msra.mxu0 0
    %396 = vmatpush.bf16.msra.mxu0 0
    %397 = vmatpush.bf16.msra.mxu0 0
    %398 = vmatpush.bf16.msra.mxu0 0
    %399 = vmatpush.bf16.msra.mxu0 0
    %400 = vmatpush.bf16.msra.mxu0 0
    %401 = vmatpush.bf16.msra.mxu0 %v224
    %402 = vmatpush.bf16.msra.mxu0 %v218
    %403 = vmatmul.bf16.gmra.mxu0 %v239
    %v404 = vpop.f32.mrf.mxu0
    %v405 = vadd.f32 0.0, %v404
    %v406 = vpop.f32.mrf.mxu0
    %v407 = vadd.f32 0.0, %v406
    %408 = vmatmul.bf16.gmra.mxu0 %v242
    %v409 = vpop.f32.mrf.mxu0
    %v410 = vadd.f32 0.0, %v409
    %v411 = vpop.f32.mrf.mxu0
    %v412 = vadd.f32 0.0, %v411
    %413 = vmatmul.bf16.gmra.mxu0 %v245
    %v414 = vpop.f32.mrf.mxu0
    %v415 = vadd.f32 0.0, %v414
    %v416 = vpop.f32.mrf.mxu0
    %v417 = vadd.f32 0.0, %v416
    %418 = vmatmul.bf16.gmra.mxu0 %v248
    %v419 = vpop.f32.mrf.mxu0
    %v420 = vadd.f32 0.0, %v419
    %v421 = vpop.f32.mrf.mxu0
    %v422 = vadd.f32 0.0, %v421
    %423 = vdwg.mxu0
    %v424 = vadd.f32 %v347, %v260
    %v425 = vadd.f32 %v376, %v289
    %v426 = vadd.f32 %v405, %v318
    %v427 = vadd.f32 %v349, %v262
    %v428 = vadd.f32 %v378, %v291
    %v429 = vadd.f32 %v407, %v320
    %v430 = vadd.f32 %v352, %v265
    %v431 = vadd.f32 %v381, %v294
    %v432 = vadd.f32 %v410, %v323
    %v433 = vadd.f32 %v354, %v267
    %v434 = vadd.f32 %v383, %v296
    %v435 = vadd.f32 %v412, %v325
    %v436 = vadd.f32 %v357, %v270
    %v437 = vadd.f32 %v386, %v299
    %v438 = vadd.f32 %v415, %v328
    %v439 = vadd.f32 %v359, %v272
    %v440 = vadd.f32 %v388, %v301
    %v441 = vadd.f32 %v417, %v330
    %v442 = vadd.f32 %v362, %v275
    %v443 = vadd.f32 %v391, %v304
    %v444 = vadd.f32 %v420, %v333
    %v445 = vadd.f32 %v364, %v277
    %v446 = vadd.f32 %v393, %v306
    %v447 = vadd.f32 %v422, %v335
    %vm448 = vcmp.gt.f32.partialorder %v424, 0.0
    %vm449 = vcmp.gt.f32.partialorder %v425, 0.0
    %vm450 = vcmp.gt.f32.partialorder %v426, 0.0
    %vm451 = vcmp.gt.f32.partialorder %v427, 0.0
    %vm452 = vcmp.gt.f32.partialorder %v428, 0.0
    %vm453 = vcmp.gt.f32.partialorder %v429, 0.0
    %vm454 = vcmp.gt.f32.partialorder %v430, 0.0
    %vm455 = vcmp.gt.f32.partialorder %v431, 0.0
    %vm456 = vcmp.gt.f32.partialorder %v432, 0.0
    %vm457 = vcmp.gt.f32.partialorder %v433, 0.0
    %vm458 = vcmp.gt.f32.partialorder %v434, 0.0
    %vm459 = vcmp.gt.f32.partialorder %v435, 0.0
    %vm460 = vcmp.gt.f32.partialorder %v436, 0.0
    %vm461 = vcmp.gt.f32.partialorder %v437, 0.0
    %vm462 = vcmp.gt.f32.partialorder %v438, 0.0
    %vm463 = vcmp.gt.f32.partialorder %v439, 0.0
    %vm464 = vcmp.gt.f32.partialorder %v440, 0.0
    %vm465 = vcmp.gt.f32.partialorder %v441, 0.0
    %vm466 = vcmp.gt.f32.partialorder %v442, 0.0
    %vm467 = vcmp.gt.f32.partialorder %v443, 0.0
    %vm468 = vcmp.gt.f32.partialorder %v444, 0.0
    %vm469 = vcmp.gt.f32.partialorder %v445, 0.0
    %vm470 = vcmp.gt.f32.partialorder %v446, 0.0
    %vm471 = vcmp.gt.f32.partialorder %v447, 0.0
    %v472 = vmul.f32 %v424, 0.2
    %v473 = vmul.f32 %v425, 0.2
    %v474 = vmul.f32 %v426, 0.2
    %v475 = vmul.f32 %v427, 0.2
    %v476 = vmul.f32 %v428, 0.2
    %v477 = vmul.f32 %v429, 0.2
    %v478 = vmul.f32 %v430, 0.2
    %v479 = vmul.f32 %v431, 0.2
    %v480 = vmul.f32 %v432, 0.2
    %v481 = vmul.f32 %v433, 0.2
    %v482 = vmul.f32 %v434, 0.2
    %v483 = vmul.f32 %v435, 0.2
    %v484 = vmul.f32 %v436, 0.2
    %v485 = vmul.f32 %v437, 0.2
    %v486 = vmul.f32 %v438, 0.2
    %v487 = vmul.f32 %v439, 0.2
    %v488 = vmul.f32 %v440, 0.2
    %v489 = vmul.f32 %v441, 0.2
    %v490 = vmul.f32 %v442, 0.2
    %v491 = vmul.f32 %v443, 0.2
    %v492 = vmul.f32 %v444, 0.2
    %v493 = vmul.f32 %v445, 0.2
    %v494 = vmul.f32 %v446, 0.2
    %v495 = vmul.f32 %v447, 0.2
    %v496 = vsel %vm448, %v424, %v472
    %v497 = vsel %vm449, %v425, %v473
    %v498 = vsel %vm450, %v426, %v474
    %v499 = vsel %vm451, %v427, %v475
    %v500 = vsel %vm452, %v428, %v476
    %v501 = vsel %vm453, %v429, %v477
    %v502 = vsel %vm454, %v430, %v478
    %v503 = vsel %vm455, %v431, %v479
    %v504 = vsel %vm456, %v432, %v480
    %v505 = vsel %vm457, %v433, %v481
    %v506 = vsel %vm458, %v434, %v482
    %v507 = vsel %vm459, %v435, %v483
    %v508 = vsel %vm460, %v436, %v484
    %v509 = vsel %vm461, %v437, %v485
    %v510 = vsel %vm462, %v438, %v486
    %v511 = vsel %vm463, %v439, %v487
    %v512 = vsel %vm464, %v440, %v488
    %v513 = vsel %vm465, %v441, %v489
    %v514 = vsel %vm466, %v442, %v490
    %v515 = vsel %vm467, %v443, %v491
    %v516 = vsel %vm468, %v444, %v492
    %v517 = vsel %vm469, %v445, %v493
    %v518 = vsel %vm470, %v446, %v494
    %v519 = vsel %vm471, %v447, %v495
    %v520 = vld [vmem:[%s1] sm:$0xff]
    %vm521 = vcmask 523264
    %v523 = vsel %vm521, %v520, 0
    %525 = vmatpush.msra.mxu0 0.0
    %526 = vmatpush.msra.mxu0 0.0
    %527 = vmatpush.msra.mxu0 0.0
    %528 = vmatpush.msra.mxu0 0.0
    %529 = vmatpush.msra.mxu0 0.0
    %530 = vmatpush.msra.mxu0 0.0
    %531 = vmatpush.msra.mxu0 0.0
    %532 = vmatpush.msra.mxu0 0.0
    %533 = vmatpush.msra.mxu0 %v517
    %534 = vmatpush.msra.mxu0 %v514
    %535 = vmatpush.msra.mxu0 %v511
    %536 = vmatpush.msra.mxu0 %v508
    %537 = vmatpush.msra.mxu0 %v505
    %538 = vmatpush.msra.mxu0 %v502
    %539 = vmatpush.msra.mxu0 %v499
    %540 = vmatpush.msra.mxu0 %v496
    %541 = vmatmul.f32.gmra.mxu0 %v523
    %v542 = vpop.f32.mrf.mxu0
    %v543 = vadd.f32 0.0, %v542
    %544 = vdwg.mxu0
    %545 = vmatpush.msra.mxu0 0.0
    %546 = vmatpush.msra.mxu0 0.0
    %547 = vmatpush.msra.mxu0 0.0
    %548 = vmatpush.msra.mxu0 0.0
    %549 = vmatpush.msra.mxu0 0.0
    %550 = vmatpush.msra.mxu0 0.0
    %551 = vmatpush.msra.mxu0 0.0
    %552 = vmatpush.msra.mxu0 0.0
    %553 = vmatpush.msra.mxu0 %v518
    %554 = vmatpush.msra.mxu0 %v515
    %555 = vmatpush.msra.mxu0 %v512
    %556 = vmatpush.msra.mxu0 %v509
    %557 = vmatpush.msra.mxu0 %v506
    %558 = vmatpush.msra.mxu0 %v503
    %559 = vmatpush.msra.mxu0 %v500
    %560 = vmatpush.msra.mxu0 %v497
    %561 = vmatmul.f32.gmra.mxu0 %v523
    %v562 = vpop.f32.mrf.mxu0
    %v563 = vadd.f32 0.0, %v562
    %564 = vdwg.mxu0
    %565 = vmatpush.msra.mxu0 0.0
    %566 = vmatpush.msra.mxu0 0.0
    %567 = vmatpush.msra.mxu0 0.0
    %568 = vmatpush.msra.mxu0 0.0
    %569 = vmatpush.msra.mxu0 0.0
    %570 = vmatpush.msra.mxu0 0.0
    %571 = vmatpush.msra.mxu0 0.0
    %572 = vmatpush.msra.mxu0 0.0
    %573 = vmatpush.msra.mxu0 %v519
    %574 = vmatpush.msra.mxu0 %v516
    %575 = vmatpush.msra.mxu0 %v513
    %576 = vmatpush.msra.mxu0 %v510
    %577 = vmatpush.msra.mxu0 %v507
    %578 = vmatpush.msra.mxu0 %v504
    %579 = vmatpush.msra.mxu0 %v501
    %580 = vmatpush.msra.mxu0 %v498
    %581 = vmatmul.f32.gmra.mxu0 %v523
    %v582 = vpop.f32.mrf.mxu0
    %v583 = vadd.f32 0.0, %v582
    %584 = vdwg.mxu0
    %585 = vst [vmem:[#allocation7] sm:$0xff] %v543
    %586 = vst [vmem:[#allocation7 + $0x8] sm:$0xff] %v563
    %587 = vst [vmem:[#allocation7 + $0x10] sm:$0xff] %v583
    %v588 = vld [vmem:[#allocation2] sm:$0x3]
    %v592 = vrot.slane %v563, 7
    %v593 = vrot.slane %v583, 6
    %vm594 = vcmask 1040384
    %v595 = vsel %vm594, %v543, %v592
    %vm596 = vcmask 1041408
    %v597 = vsel %vm596, %v595, %v593
    %vm598 = vcmask 1041409
    %v599 = vsel %vm598, %v543, %v592
    %vm600 = vcmask 1042433
    %v601 = vsel %vm600, %v599, %v593
    %v602 = vrot.slane %v601, 1
    %vm603 = vcmp.eq.s32.totalorder %v77, 1
    %vm604 = vcmp.eq.s32.totalorder %v78, 1
    %vm605 = vcmp.eq.s32.totalorder %v79, 1
    %vm606 = vcmp.eq.s32.totalorder %v83, 1
    %vm607 = vcmp.eq.s32.totalorder %v84, 1
    %vm608 = vcmp.eq.s32.totalorder %v85, 1
    %vm609 = vcmp.eq.s32.totalorder %v89, 1
    %vm610 = vcmp.eq.s32.totalorder %v90, 1
    %vm611 = vcmp.eq.s32.totalorder %v91, 1
    %vm612 = vcmp.eq.s32.totalorder %v95, 1
    %vm613 = vcmp.eq.s32.totalorder %v96, 1
    %vm614 = vcmp.eq.s32.totalorder %v97, 1
    %v615 = vperm.slane %v597, 0
    %v616 = vperm.slane %v597, 1
    %v617 = vperm.slane %v597, 2
    %v618 = vperm.slane %v602, 0
    %v619 = vperm.slane %v602, 1
    %v620 = vperm.slane %v602, 2
    %v627 = vsel %vm603, %v615, -1e+30
    %v628 = vsel %vm604, %v616, -1e+30
    %v629 = vsel %vm605, %v617, -1e+30
    %v630 = vsel %vm606, %v615, -1e+30
    %v631 = vsel %vm607, %v616, -1e+30
    %v632 = vsel %vm608, %v617, -1e+30
    %v633 = vsel %vm609, %v615, -1e+30
    %v634 = vsel %vm610, %v616, -1e+30
    %v635 = vsel %vm611, %v617, -1e+30
    %v636 = vsel %vm612, %v615, -1e+30
    %v637 = vsel %vm613, %v616, -1e+30
    %v638 = vsel %vm614, %v617, -1e+30
    %v639 = vsel %vm603, %v618, -1e+30
    %v640 = vsel %vm604, %v619, -1e+30
    %v641 = vsel %vm605, %v620, -1e+30
    %v642 = vsel %vm606, %v618, -1e+30
    %v643 = vsel %vm607, %v619, -1e+30
    %v644 = vsel %vm608, %v620, -1e+30
    %v645 = vsel %vm609, %v618, -1e+30
    %v646 = vsel %vm610, %v619, -1e+30
    %v647 = vsel %vm611, %v620, -1e+30
    %v648 = vsel %vm612, %v618, -1e+30
    %v649 = vsel %vm613, %v619, -1e+30
    %v650 = vsel %vm614, %v620, -1e+30
    %v651 = vmax.f32 %v627, %v628
    %v652 = vmax.f32 %v651, %v629
    %653 = vmax.xlane.f32.xlu0 %v652
    %v654 = vpop.xlane.xlu0 %653
    %v655 = vmax.f32 %v630, %v631
    %v656 = vmax.f32 %v655, %v632
    %657 = vmax.xlane.f32.xlu0 %v656
    %v658 = vpop.xlane.xlu0 %657
    %v659 = vmax.f32 %v633, %v634
    %v660 = vmax.f32 %v659, %v635
    %661 = vmax.xlane.f32.xlu0 %v660
    %v662 = vpop.xlane.xlu0 %661
    %v663 = vmax.f32 %v636, %v637
    %v664 = vmax.f32 %v663, %v638
    %665 = vmax.xlane.f32.xlu0 %v664
    %v666 = vpop.xlane.xlu0 %665
    %v667 = vmax.f32 %v639, %v640
    %v668 = vmax.f32 %v667, %v641
    %669 = vmax.xlane.f32.xlu0 %v668
    %v670 = vpop.xlane.xlu0 %669
    %v671 = vmax.f32 %v642, %v643
    %v672 = vmax.f32 %v671, %v644
    %673 = vmax.xlane.f32.xlu0 %v672
    %v674 = vpop.xlane.xlu0 %673
    %v675 = vmax.f32 %v645, %v646
    %v676 = vmax.f32 %v675, %v647
    %677 = vmax.xlane.f32.xlu0 %v676
    %v678 = vpop.xlane.xlu0 %677
    %v679 = vmax.f32 %v648, %v649
    %v680 = vmax.f32 %v679, %v650
    %681 = vmax.xlane.f32.xlu0 %v680
    %v682 = vpop.xlane.xlu0 %681
    %v691 = vlaneseq
    %v692 = vand.u32 %v691, 127
    %v693 = vperm.slane %v654, %v692
    %v694 = vadd.s32 %v692, 4294967288
    %v695 = vperm.slane %v658, %v694
    %vm696 = vcmask 130112
    %v697 = vsel %vm696, %v695, %v693
    %v698 = vadd.s32 %v692, 4294967280
    %v699 = vperm.slane %v662, %v698
    %vm700 = vcmask 195712
    %v701 = vsel %vm700, %v699, %v697
    %v702 = vadd.s32 %v692, 4294967272
    %v703 = vperm.slane %v666, %v702
    %vm704 = vcmask 261312
    %v705 = vsel %vm704, %v703, %v701
    %v706 = vperm.slane %v670, %v692
    %v707 = vperm.slane %v674, %v694
    %v708 = vsel %vm696, %v707, %v706
    %v709 = vperm.slane %v678, %v698
    %v710 = vsel %vm700, %v709, %v708
    %v711 = vperm.slane %v682, %v702
    %v712 = vsel %vm704, %v711, %v710
    %v713 = vsel %vm598, %v712, %v705
    %v715 = vmax.f32 %v588, %v713
    %v716 = vsub.f32 %v588, %v715
    %v717 = vmul.f32 %v716, 1.442695
    %v718 = vpow.pop %v717
    %v720 = vsel %vm237, %v715, 0
    %722 = vmatpush.msra.mxu0 0.0
    %723 = vmatpush.msra.mxu0 0.0
    %724 = vmatpush.msra.mxu0 0.0
    %725 = vmatpush.msra.mxu0 0.0
    %726 = vmatpush.msra.mxu0 0.0
    %727 = vmatpush.msra.mxu0 0.0
    %728 = vmatpush.msra.mxu0 0.0
    %729 = vmatpush.msra.mxu0 0.0
    %730 = vmatpush.msra.mxu0 0.0
    %731 = vmatpush.msra.mxu0 0.0
    %732 = vmatpush.msra.mxu0 0.0
    %733 = vmatpush.msra.mxu0 0.0
    %734 = vmatpush.msra.mxu0 %v146
    %735 = vmatpush.msra.mxu0 %v143
    %736 = vmatpush.msra.mxu0 %v140
    %737 = vmatpush.msra.mxu0 %v137
    %738 = vmatmul.f32.gmra.mxu0 %v720
    %v739 = vpop.f32.mrf.mxu0
    %v740 = vadd.f32 0.0, %v739
    %741 = vdwg.mxu0
    %742 = vmatpush.msra.mxu0 0.0
    %743 = vmatpush.msra.mxu0 0.0
    %744 = vmatpush.msra.mxu0 0.0
    %745 = vmatpush.msra.mxu0 0.0
    %746 = vmatpush.msra.mxu0 0.0
    %747 = vmatpush.msra.mxu0 0.0
    %748 = vmatpush.msra.mxu0 0.0
    %749 = vmatpush.msra.mxu0 0.0
    %750 = vmatpush.msra.mxu0 0.0
    %751 = vmatpush.msra.mxu0 0.0
    %752 = vmatpush.msra.mxu0 0.0
    %753 = vmatpush.msra.mxu0 0.0
    %754 = vmatpush.msra.mxu0 %v147
    %755 = vmatpush.msra.mxu0 %v144
    %756 = vmatpush.msra.mxu0 %v141
    %757 = vmatpush.msra.mxu0 %v138
    %758 = vmatmul.f32.gmra.mxu0 %v720
    %v759 = vpop.f32.mrf.mxu0
    %v760 = vadd.f32 0.0, %v759
    %761 = vdwg.mxu0
    %762 = vmatpush.msra.mxu0 0.0
    %763 = vmatpush.msra.mxu0 0.0
    %764 = vmatpush.msra.mxu0 0.0
    %765 = vmatpush.msra.mxu0 0.0
    %766 = vmatpush.msra.mxu0 0.0
    %767 = vmatpush.msra.mxu0 0.0
    %768 = vmatpush.msra.mxu0 0.0
    %769 = vmatpush.msra.mxu0 0.0
    %770 = vmatpush.msra.mxu0 0.0
    %771 = vmatpush.msra.mxu0 0.0
    %772 = vmatpush.msra.mxu0 0.0
    %773 = vmatpush.msra.mxu0 0.0
    %774 = vmatpush.msra.mxu0 %v148
    %775 = vmatpush.msra.mxu0 %v145
    %776 = vmatpush.msra.mxu0 %v142
    %777 = vmatpush.msra.mxu0 %v139
    %778 = vmatmul.f32.gmra.mxu0 %v720
    %v779 = vpop.f32.mrf.mxu0
    %v780 = vadd.f32 0.0, %v779
    %781 = vdwg.mxu0
    %v782 = vsub.f32 %v543, %v740
    %v783 = vsub.f32 %v563, %v760
    %v784 = vsub.f32 %v583, %v780
    %v785 = vmin.f32 %v782, 0.0
    %v786 = vmin.f32 %v783, 0.0
    %v787 = vmin.f32 %v784, 0.0
    %v788 = vmul.f32 %v785, 1.442695
    %v789 = vpow.pop %v788
    %v790 = vmul.f32 %v786, 1.442695
    %v791 = vpow.pop %v790
    %v792 = vmul.f32 %v787, 1.442695
    %v793 = vpow.pop %v792
    %v794 = vld [vmem:[%s2] sm:$0xff]
    %v795 = vld [vmem:[%s2 + $0x8] sm:$0xff]
    %v796 = vld [vmem:[%s2 + $0x10] sm:$0xff]
    %v797 = vld [vmem:[%s2 + $0x18] sm:$0xff]
    %v798 = vld [vmem:[%s2 + $0x20] sm:$0xff]
    %v799 = vld [vmem:[%s2 + $0x28] sm:$0xff]
    %v800 = vld [vmem:[%s2 + $0x30] sm:$0xff]
    %v801 = vld [vmem:[%s2 + $0x38] sm:$0xff]
    %vm802 = vcmask 15360
    %v804 = vsel %vm802, %v794, 0
    %v807 = vsel %vm802, %v795, 0
    %v810 = vsel %vm802, %v796, 0
    %v813 = vsel %vm802, %v797, 0
    %v816 = vsel %vm802, %v798, 0
    %v819 = vsel %vm802, %v799, 0
    %v822 = vsel %vm802, %v800, 0
    %v825 = vsel %vm802, %v801, 0
    %v828 = vsel %vm596, %v789, 0
    %v831 = vsel %vm596, %v791, 0
    %v834 = vsel %vm596, %v793, 0
    %836 = vmatpush.msra.mxu0 0.0
    %837 = vmatpush.msra.mxu0 0.0
    %838 = vmatpush.msra.mxu0 0.0
    %839 = vmatpush.msra.mxu0 0.0
    %840 = vmatpush.msra.mxu0 0.0
    %841 = vmatpush.msra.mxu0 0.0
    %842 = vmatpush.msra.mxu0 0.0
    %843 = vmatpush.msra.mxu0 0.0
    %844 = vmatpush.msra.mxu0 0.0
    %845 = vmatpush.msra.mxu0 0.0
    %846 = vmatpush.msra.mxu0 0.0
    %847 = vmatpush.msra.mxu0 0.0
    %848 = vmatpush.msra.mxu0 0.0
    %849 = vmatpush.msra.mxu0 0.0
    %850 = vmatpush.msra.mxu0 0.0
    %851 = vmatpush.msra.mxu0 %v828
    %852 = vmatmul.f32.gmra.mxu0 %v804
    %v853 = vpop.f32.mrf.mxu0
    %v854 = vadd.f32 0.0, %v853
    %855 = vmatmul.f32.gmra.mxu0 %v807
    %v856 = vpop.f32.mrf.mxu0
    %v857 = vadd.f32 0.0, %v856
    %858 = vmatmul.f32.gmra.mxu0 %v810
    %v859 = vpop.f32.mrf.mxu0
    %v860 = vadd.f32 0.0, %v859
    %861 = vmatmul.f32.gmra.mxu0 %v813
    %v862 = vpop.f32.mrf.mxu0
    %v863 = vadd.f32 0.0, %v862
    %864 = vmatmul.f32.gmra.mxu0 %v816
    %v865 = vpop.f32.mrf.mxu0
    %v866 = vadd.f32 0.0, %v865
    %867 = vmatmul.f32.gmra.mxu0 %v819
    %v868 = vpop.f32.mrf.mxu0
    %v869 = vadd.f32 0.0, %v868
    %870 = vmatmul.f32.gmra.mxu0 %v822
    %v871 = vpop.f32.mrf.mxu0
    %v872 = vadd.f32 0.0, %v871
    %873 = vmatmul.f32.gmra.mxu0 %v825
    %v874 = vpop.f32.mrf.mxu0
    %v875 = vadd.f32 0.0, %v874
    %876 = vdwg.mxu0
    %877 = vmatpush.msra.mxu0 0.0
    %878 = vmatpush.msra.mxu0 0.0
    %879 = vmatpush.msra.mxu0 0.0
    %880 = vmatpush.msra.mxu0 0.0
    %881 = vmatpush.msra.mxu0 0.0
    %882 = vmatpush.msra.mxu0 0.0
    %883 = vmatpush.msra.mxu0 0.0
    %884 = vmatpush.msra.mxu0 0.0
    %885 = vmatpush.msra.mxu0 0.0
    %886 = vmatpush.msra.mxu0 0.0
    %887 = vmatpush.msra.mxu0 0.0
    %888 = vmatpush.msra.mxu0 0.0
    %889 = vmatpush.msra.mxu0 0.0
    %890 = vmatpush.msra.mxu0 0.0
    %891 = vmatpush.msra.mxu0 0.0
    %892 = vmatpush.msra.mxu0 %v831
    %893 = vmatmul.f32.gmra.mxu0 %v804
    %v894 = vpop.f32.mrf.mxu0
    %v895 = vadd.f32 0.0, %v894
    %896 = vmatmul.f32.gmra.mxu0 %v807
    %v897 = vpop.f32.mrf.mxu0
    %v898 = vadd.f32 0.0, %v897
    %899 = vmatmul.f32.gmra.mxu0 %v810
    %v900 = vpop.f32.mrf.mxu0
    %v901 = vadd.f32 0.0, %v900
    %902 = vmatmul.f32.gmra.mxu0 %v813
    %v903 = vpop.f32.mrf.mxu0
    %v904 = vadd.f32 0.0, %v903
    %905 = vmatmul.f32.gmra.mxu0 %v816
    %v906 = vpop.f32.mrf.mxu0
    %v907 = vadd.f32 0.0, %v906
    %908 = vmatmul.f32.gmra.mxu0 %v819
    %v909 = vpop.f32.mrf.mxu0
    %v910 = vadd.f32 0.0, %v909
    %911 = vmatmul.f32.gmra.mxu0 %v822
    %v912 = vpop.f32.mrf.mxu0
    %v913 = vadd.f32 0.0, %v912
    %914 = vmatmul.f32.gmra.mxu0 %v825
    %v915 = vpop.f32.mrf.mxu0
    %v916 = vadd.f32 0.0, %v915
    %917 = vdwg.mxu0
    %918 = vmatpush.msra.mxu0 0.0
    %919 = vmatpush.msra.mxu0 0.0
    %920 = vmatpush.msra.mxu0 0.0
    %921 = vmatpush.msra.mxu0 0.0
    %922 = vmatpush.msra.mxu0 0.0
    %923 = vmatpush.msra.mxu0 0.0
    %924 = vmatpush.msra.mxu0 0.0
    %925 = vmatpush.msra.mxu0 0.0
    %926 = vmatpush.msra.mxu0 0.0
    %927 = vmatpush.msra.mxu0 0.0
    %928 = vmatpush.msra.mxu0 0.0
    %929 = vmatpush.msra.mxu0 0.0
    %930 = vmatpush.msra.mxu0 0.0
    %931 = vmatpush.msra.mxu0 0.0
    %932 = vmatpush.msra.mxu0 0.0
    %933 = vmatpush.msra.mxu0 %v834
    %934 = vmatmul.f32.gmra.mxu0 %v804
    %v935 = vpop.f32.mrf.mxu0
    %v936 = vadd.f32 0.0, %v935
    %937 = vmatmul.f32.gmra.mxu0 %v807
    %v938 = vpop.f32.mrf.mxu0
    %v939 = vadd.f32 0.0, %v938
    %940 = vmatmul.f32.gmra.mxu0 %v810
    %v941 = vpop.f32.mrf.mxu0
    %v942 = vadd.f32 0.0, %v941
    %943 = vmatmul.f32.gmra.mxu0 %v813
    %v944 = vpop.f32.mrf.mxu0
    %v945 = vadd.f32 0.0, %v944
    %946 = vmatmul.f32.gmra.mxu0 %v816
    %v947 = vpop.f32.mrf.mxu0
    %v948 = vadd.f32 0.0, %v947
    %949 = vmatmul.f32.gmra.mxu0 %v819
    %v950 = vpop.f32.mrf.mxu0
    %v951 = vadd.f32 0.0, %v950
    %952 = vmatmul.f32.gmra.mxu0 %v822
    %v953 = vpop.f32.mrf.mxu0
    %v954 = vadd.f32 0.0, %v953
    %955 = vmatmul.f32.gmra.mxu0 %v825
    %v956 = vpop.f32.mrf.mxu0
    %v957 = vadd.f32 0.0, %v956
    %958 = vdwg.mxu0
    %v959 = vmul.f32 %v260, %v854
    %v960 = vmul.f32 %v289, %v895
    %v961 = vmul.f32 %v318, %v936
    %v962 = vmul.f32 %v262, %v857
    %v963 = vmul.f32 %v291, %v898
    %v964 = vmul.f32 %v320, %v939
    %v965 = vmul.f32 %v265, %v860
    %v966 = vmul.f32 %v294, %v901
    %v967 = vmul.f32 %v323, %v942
    %v968 = vmul.f32 %v267, %v863
    %v969 = vmul.f32 %v296, %v904
    %v970 = vmul.f32 %v325, %v945
    %v971 = vmul.f32 %v270, %v866
    %v972 = vmul.f32 %v299, %v907
    %v973 = vmul.f32 %v328, %v948
    %v974 = vmul.f32 %v272, %v869
    %v975 = vmul.f32 %v301, %v910
    %v976 = vmul.f32 %v330, %v951
    %v977 = vmul.f32 %v275, %v872
    %v978 = vmul.f32 %v304, %v913
    %v979 = vmul.f32 %v333, %v954
    %v980 = vmul.f32 %v277, %v875
    %v981 = vmul.f32 %v306, %v916
    %v982 = vmul.f32 %v335, %v957
    %v983 = vpack.c.bf16 %v962, %v959
    %v984 = vpack.c.bf16 %v963, %v960
    %v985 = vpack.c.bf16 %v964, %v961
    %v986 = vpack.c.bf16 %v968, %v965
    %v987 = vpack.c.bf16 %v969, %v966
    %v988 = vpack.c.bf16 %v970, %v967
    %v989 = vpack.c.bf16 %v974, %v971
    %v990 = vpack.c.bf16 %v975, %v972
    %v991 = vpack.c.bf16 %v976, %v973
    %v992 = vpack.c.bf16 %v980, %v977
    %v993 = vpack.c.bf16 %v981, %v978
    %v994 = vpack.c.bf16 %v982, %v979
    %v995 = vpack.c.bf16 %v789, %v789
    %v996 = vpack.c.bf16 %v791, %v791
    %v997 = vpack.c.bf16 %v793, %v793
    %998 = vmatpush.bf16.xpose.msra.mxu0 0
    %999 = vmatpush.bf16.xpose.msra.mxu0 0
    %1000 = vmatpush.bf16.xpose.msra.mxu0 0
    %1001 = vmatpush.bf16.xpose.msra.mxu0 0
    %1002 = vmatpush.bf16.xpose.msra.mxu0 0
    %1003 = vmatpush.bf16.xpose.msra.mxu0 0
    %1004 = vmatpush.bf16.xpose.msra.mxu0 %v219
    %1005 = vmatpush.bf16.xpose.msra.mxu0 %v213
    %1006 = vmatmul.bf16.gmra.mxu0 %v983
    %v1007 = vpop.f32.mrf.mxu0
    %v1008 = vadd.f32 0.0, %v1007
    %v1009 = vpop.f32.mrf.mxu0
    %v1010 = vadd.f32 0.0, %v1009
    %1011 = vmatmul.bf16.gmra.mxu0 %v986
    %v1012 = vpop.f32.mrf.mxu0
    %v1013 = vadd.f32 0.0, %v1012
    %v1014 = vpop.f32.mrf.mxu0
    %v1015 = vadd.f32 0.0, %v1014
    %1016 = vmatmul.bf16.gmra.mxu0 %v989
    %v1017 = vpop.f32.mrf.mxu0
    %v1018 = vadd.f32 0.0, %v1017
    %v1019 = vpop.f32.mrf.mxu0
    %v1020 = vadd.f32 0.0, %v1019
    %1021 = vmatmul.bf16.gmra.mxu0 %v992
    %v1022 = vpop.f32.mrf.mxu0
    %v1023 = vadd.f32 0.0, %v1022
    %v1024 = vpop.f32.mrf.mxu0
    %v1025 = vadd.f32 0.0, %v1024
    %1026 = vmatmul.bf16.gmra.mxu0 %v995
    %v1027 = vpop.f32.mrf.mxu0
    %v1028 = vadd.f32 0.0, %v1027
    %v1029 = vpop.f32.mrf.mxu0
    %1030 = vdwg.mxu0
    %1031 = vmatpush.bf16.xpose.msra.mxu0 0
    %1032 = vmatpush.bf16.xpose.msra.mxu0 0
    %1033 = vmatpush.bf16.xpose.msra.mxu0 0
    %1034 = vmatpush.bf16.xpose.msra.mxu0 0
    %1035 = vmatpush.bf16.xpose.msra.mxu0 0
    %1036 = vmatpush.bf16.xpose.msra.mxu0 0
    %1037 = vmatpush.bf16.xpose.msra.mxu0 %v220
    %1038 = vmatpush.bf16.xpose.msra.mxu0 %v214
    %1039 = vmatmul.bf16.gmra.mxu0 %v984
    %v1040 = vpop.f32.mrf.mxu0
    %v1041 = vadd.f32 %v1008, %v1040
    %v1042 = vpop.f32.mrf.mxu0
    %v1043 = vadd.f32 %v1010, %v1042
    %1044 = vmatmul.bf16.gmra.mxu0 %v987
    %v1045 = vpop.f32.mrf.mxu0
    %v1046 = vadd.f32 %v1013, %v1045
    %v1047 = vpop.f32.mrf.mxu0
    %v1048 = vadd.f32 %v1015, %v1047
    %1049 = vmatmul.bf16.gmra.mxu0 %v990
    %v1050 = vpop.f32.mrf.mxu0
    %v1051 = vadd.f32 %v1018, %v1050
    %v1052 = vpop.f32.mrf.mxu0
    %v1053 = vadd.f32 %v1020, %v1052
    %1054 = vmatmul.bf16.gmra.mxu0 %v993
    %v1055 = vpop.f32.mrf.mxu0
    %v1056 = vadd.f32 %v1023, %v1055
    %v1057 = vpop.f32.mrf.mxu0
    %v1058 = vadd.f32 %v1025, %v1057
    %1059 = vmatmul.bf16.gmra.mxu0 %v996
    %v1060 = vpop.f32.mrf.mxu0
    %v1061 = vadd.f32 %v1028, %v1060
    %v1062 = vpop.f32.mrf.mxu0
    %1063 = vdwg.mxu0
    %1064 = vmatpush.bf16.xpose.msra.mxu0 0
    %1065 = vmatpush.bf16.xpose.msra.mxu0 0
    %1066 = vmatpush.bf16.xpose.msra.mxu0 0
    %1067 = vmatpush.bf16.xpose.msra.mxu0 0
    %1068 = vmatpush.bf16.xpose.msra.mxu0 0
    %1069 = vmatpush.bf16.xpose.msra.mxu0 0
    %1070 = vmatpush.bf16.xpose.msra.mxu0 %v221
    %1071 = vmatpush.bf16.xpose.msra.mxu0 %v215
    %1072 = vmatmul.bf16.gmra.mxu0 %v985
    %v1073 = vpop.f32.mrf.mxu0
    %v1074 = vadd.f32 %v1041, %v1073
    %v1075 = vpop.f32.mrf.mxu0
    %v1076 = vadd.f32 %v1043, %v1075
    %1077 = vmatmul.bf16.gmra.mxu0 %v988
    %v1078 = vpop.f32.mrf.mxu0
    %v1079 = vadd.f32 %v1046, %v1078
    %v1080 = vpop.f32.mrf.mxu0
    %v1081 = vadd.f32 %v1048, %v1080
    %1082 = vmatmul.bf16.gmra.mxu0 %v991
    %v1083 = vpop.f32.mrf.mxu0
    %v1084 = vadd.f32 %v1051, %v1083
    %v1085 = vpop.f32.mrf.mxu0
    %v1086 = vadd.f32 %v1053, %v1085
    %1087 = vmatmul.bf16.gmra.mxu0 %v994
    %v1088 = vpop.f32.mrf.mxu0
    %v1089 = vadd.f32 %v1056, %v1088
    %v1090 = vpop.f32.mrf.mxu0
    %v1091 = vadd.f32 %v1058, %v1090
    %1092 = vmatmul.bf16.gmra.mxu0 %v997
    %v1093 = vpop.f32.mrf.mxu0
    %v1094 = vadd.f32 %v1061, %v1093
    %v1095 = vpop.f32.mrf.mxu0
    %1096 = vdwg.mxu0
    %v1098 = vsel %vm596, %v718, 0
    %1100 = vmatpush.msra.mxu0 0.0
    %1101 = vmatpush.msra.mxu0 0.0
    %1102 = vmatpush.msra.mxu0 0.0
    %1103 = vmatpush.msra.mxu0 0.0
    %1104 = vmatpush.msra.mxu0 0.0
    %1105 = vmatpush.msra.mxu0 0.0
    %1106 = vmatpush.msra.mxu0 0.0
    %1107 = vmatpush.msra.mxu0 0.0
    %1108 = vmatpush.msra.mxu0 0.0
    %1109 = vmatpush.msra.mxu0 0.0
    %1110 = vmatpush.msra.mxu0 0.0
    %1111 = vmatpush.msra.mxu0 0.0
    %1112 = vmatpush.msra.mxu0 0.0
    %1113 = vmatpush.msra.mxu0 0.0
    %1114 = vmatpush.msra.mxu0 0.0
    %1115 = vmatpush.msra.mxu0 %v1098
    %1116 = vmatmul.f32.gmra.mxu0 %v804
    %v1117 = vpop.f32.mrf.mxu0
    %v1118 = vadd.f32 0.0, %v1117
    %1119 = vmatmul.f32.gmra.mxu0 %v807
    %v1120 = vpop.f32.mrf.mxu0
    %v1121 = vadd.f32 0.0, %v1120
    %1122 = vmatmul.f32.gmra.mxu0 %v810
    %v1123 = vpop.f32.mrf.mxu0
    %v1124 = vadd.f32 0.0, %v1123
    %1125 = vmatmul.f32.gmra.mxu0 %v813
    %v1126 = vpop.f32.mrf.mxu0
    %v1127 = vadd.f32 0.0, %v1126
    %1128 = vmatmul.f32.gmra.mxu0 %v816
    %v1129 = vpop.f32.mrf.mxu0
    %v1130 = vadd.f32 0.0, %v1129
    %1131 = vmatmul.f32.gmra.mxu0 %v819
    %v1132 = vpop.f32.mrf.mxu0
    %v1133 = vadd.f32 0.0, %v1132
    %1134 = vmatmul.f32.gmra.mxu0 %v822
    %v1135 = vpop.f32.mrf.mxu0
    %v1136 = vadd.f32 0.0, %v1135
    %1137 = vmatmul.f32.gmra.mxu0 %v825
    %v1138 = vpop.f32.mrf.mxu0
    %v1139 = vadd.f32 0.0, %v1138
    %1140 = vdwg.mxu0
    %v1141 = vld [vmem:[#allocation4] sm:$0xff]
    %v1142 = vld [vmem:[#allocation4 + $0x8] sm:$0xff]
    %v1143 = vld [vmem:[#allocation4 + $0x10] sm:$0xff]
    %v1144 = vld [vmem:[#allocation4 + $0x18] sm:$0xff]
    %v1145 = vld [vmem:[#allocation4 + $0x20] sm:$0xff]
    %v1146 = vld [vmem:[#allocation4 + $0x28] sm:$0xff]
    %v1147 = vld [vmem:[#allocation4 + $0x30] sm:$0xff]
    %v1148 = vld [vmem:[#allocation4 + $0x38] sm:$0xff]
    %v1149 = vmul.f32 %v1141, %v1118
    %v1150 = vmul.f32 %v1142, %v1121
    %v1151 = vmul.f32 %v1143, %v1124
    %v1152 = vmul.f32 %v1144, %v1127
    %v1153 = vmul.f32 %v1145, %v1130
    %v1154 = vmul.f32 %v1146, %v1133
    %v1155 = vmul.f32 %v1147, %v1136
    %v1156 = vmul.f32 %v1148, %v1139
    %v1157 = vadd.f32 %v1149, %v1074
    %v1158 = vadd.f32 %v1150, %v1076
    %v1159 = vadd.f32 %v1151, %v1079
    %v1160 = vadd.f32 %v1152, %v1081
    %v1161 = vadd.f32 %v1153, %v1084
    %v1162 = vadd.f32 %v1154, %v1086
    %v1163 = vadd.f32 %v1155, %v1089
    %v1164 = vadd.f32 %v1156, %v1091
    %1165 = vst.msk [vmem:[#allocation4] sm:$0xff] %vm237, %v1157
    %1166 = vst.msk [vmem:[#allocation4 + $0x8] sm:$0xff] %vm237, %v1158
    %1167 = vst.msk [vmem:[#allocation4 + $0x10] sm:$0xff] %vm237, %v1159
    %1168 = vst.msk [vmem:[#allocation4 + $0x18] sm:$0xff] %vm237, %v1160
    %1169 = vst.msk [vmem:[#allocation4 + $0x20] sm:$0xff] %vm237, %v1161
    %1170 = vst.msk [vmem:[#allocation4 + $0x28] sm:$0xff] %vm237, %v1162
    %1171 = vst.msk [vmem:[#allocation4 + $0x30] sm:$0xff] %vm237, %v1163
    %1172 = vst.msk [vmem:[#allocation4 + $0x38] sm:$0xff] %vm237, %v1164
    %v1173 = vld [vmem:[#allocation3] sm:$0x3]
    %v1174 = vmul.f32 %v1173, %v718
    %v1175 = vadd.f32 %v1174, %v1094
    %vm1176 = vcmask 254976
    %1177 = vst.msk [vmem:[#allocation3] sm:$0x3] %vm1176, %v1175
    %1178 = vst.msk [vmem:[#allocation2] sm:$0x3] %vm1176, %v715
    // Predicated region
    $region26: #{tpu_custom_call.1} parent=1 // pred_check
      %p1179 = pneg %p25
    $region27: #{tpu_custom_call.1} parent=1 // pred_check_branch
      %1181 = sbr.rel (%p1179) target = $region29
    $region28: #{tpu_custom_call.1} parent=1 // pred_region
      %v1182 = vld [vmem:[#allocation3] sm:$0x3]
      %v1183 = vadd.f32 %v1182, 1e-16
      %v1184 = vrcp.pop %v1183
      %v1185 = vmul.f32 %v1183, %v1184
      %v1186 = vsub.f32 1.0, %v1185
      %v1187 = vmul.f32 %v1184, %v1186
      %v1188 = vadd.f32 %v1184, %v1187
      %vm1189 = vweird.f32 %v1183
      %vm1190 = vweird.f32 %v1184
      %vm1191 = vmor %vm1189, %vm1190
      %v1192 = vsel %vm1191, %v1184, %v1188
      %v1193 = vand.u32 2147483647, %v1183
      %vm1194 = vcmp.eq.f32.partialorder %v1193, 8.507059e+37
      %v1195 = vand.u32 %v1183, 2147483648
      %v1196 = vor.u32 1.1754944e-38, %v1195
      %v1197 = vsel %vm1194, %v1196, %v1192
      %v1198 = vmul.f32 1.0, %v1197
      %v1199 = vld [vmem:[%s2] sm:$0xff]
      %v1200 = vld [vmem:[%s2 + $0x8] sm:$0xff]
      %v1201 = vld [vmem:[%s2 + $0x10] sm:$0xff]
      %v1202 = vld [vmem:[%s2 + $0x18] sm:$0xff]
      %v1203 = vld [vmem:[%s2 + $0x20] sm:$0xff]
      %v1204 = vld [vmem:[%s2 + $0x28] sm:$0xff]
      %v1205 = vld [vmem:[%s2 + $0x30] sm:$0xff]
      %v1206 = vld [vmem:[%s2 + $0x38] sm:$0xff]
      %v1208 = vsel %vm802, %v1199, 0
      %v1211 = vsel %vm802, %v1200, 0
      %v1214 = vsel %vm802, %v1201, 0
      %v1217 = vsel %vm802, %v1202, 0
      %v1220 = vsel %vm802, %v1203, 0
      %v1223 = vsel %vm802, %v1204, 0
      %v1226 = vsel %vm802, %v1205, 0
      %v1229 = vsel %vm802, %v1206, 0
      %v1232 = vsel %vm596, %v1198, 0
      %1234 = vmatpush.msra.mxu0 0.0
      %1235 = vmatpush.msra.mxu0 0.0
      %1236 = vmatpush.msra.mxu0 0.0
      %1237 = vmatpush.msra.mxu0 0.0
      %1238 = vmatpush.msra.mxu0 0.0
      %1239 = vmatpush.msra.mxu0 0.0
      %1240 = vmatpush.msra.mxu0 0.0
      %1241 = vmatpush.msra.mxu0 0.0
      %1242 = vmatpush.msra.mxu0 0.0
      %1243 = vmatpush.msra.mxu0 0.0
      %1244 = vmatpush.msra.mxu0 0.0
      %1245 = vmatpush.msra.mxu0 0.0
      %1246 = vmatpush.msra.mxu0 0.0
      %1247 = vmatpush.msra.mxu0 0.0
      %1248 = vmatpush.msra.mxu0 0.0
      %1249 = vmatpush.msra.mxu0 %v1232
      %1250 = vmatmul.f32.gmra.mxu0 %v1208
      %v1251 = vpop.f32.mrf.mxu0
      %v1252 = vadd.f32 0.0, %v1251
      %1253 = vmatmul.f32.gmra.mxu0 %v1211
      %v1254 = vpop.f32.mrf.mxu0
      %v1255 = vadd.f32 0.0, %v1254
      %1256 = vmatmul.f32.gmra.mxu0 %v1214
      %v1257 = vpop.f32.mrf.mxu0
      %v1258 = vadd.f32 0.0, %v1257
      %1259 = vmatmul.f32.gmra.mxu0 %v1217
      %v1260 = vpop.f32.mrf.mxu0
      %v1261 = vadd.f32 0.0, %v1260
      %1262 = vmatmul.f32.gmra.mxu0 %v1220
      %v1263 = vpop.f32.mrf.mxu0
      %v1264 = vadd.f32 0.0, %v1263
      %1265 = vmatmul.f32.gmra.mxu0 %v1223
      %v1266 = vpop.f32.mrf.mxu0
      %v1267 = vadd.f32 0.0, %v1266
      %1268 = vmatmul.f32.gmra.mxu0 %v1226
      %v1269 = vpop.f32.mrf.mxu0
      %v1270 = vadd.f32 0.0, %v1269
      %1271 = vmatmul.f32.gmra.mxu0 %v1229
      %v1272 = vpop.f32.mrf.mxu0
      %v1273 = vadd.f32 0.0, %v1272
      %1274 = vdwg.mxu0
      %v1275 = vld [vmem:[#allocation4] sm:$0xff]
      %v1276 = vld [vmem:[#allocation4 + $0x8] sm:$0xff]
      %v1277 = vld [vmem:[#allocation4 + $0x10] sm:$0xff]
      %v1278 = vld [vmem:[#allocation4 + $0x18] sm:$0xff]
      %v1279 = vld [vmem:[#allocation4 + $0x20] sm:$0xff]
      %v1280 = vld [vmem:[#allocation4 + $0x28] sm:$0xff]
      %v1281 = vld [vmem:[#allocation4 + $0x30] sm:$0xff]
      %v1282 = vld [vmem:[#allocation4 + $0x38] sm:$0xff]
      %v1283 = vmul.f32 %v1275, %v1252
      %v1284 = vmul.f32 %v1276, %v1255
      %v1285 = vmul.f32 %v1277, %v1258
      %v1286 = vmul.f32 %v1278, %v1261
      %v1287 = vmul.f32 %v1279, %v1264
      %v1288 = vmul.f32 %v1280, %v1267
      %v1289 = vmul.f32 %v1281, %v1270
      %v1290 = vmul.f32 %v1282, %v1273
      %v1291 = vld [vmem:[%s3] sm:$0xff]
      %v1292 = vld [vmem:[%s3 + $0x8] sm:$0xff]
      %v1293 = vld [vmem:[%s3 + $0x10] sm:$0xff]
      %v1294 = vld [vmem:[%s3 + $0x18] sm:$0xff]
      %v1296 = vsel %vm521, %v1291, 0
      %v1299 = vsel %vm521, %v1292, 0
      %v1302 = vsel %vm521, %v1293, 0
      %v1305 = vsel %vm521, %v1294, 0
      %1307 = vmatpush.msra.mxu0 0.0
      %1308 = vmatpush.msra.mxu0 0.0
      %1309 = vmatpush.msra.mxu0 0.0
      %1310 = vmatpush.msra.mxu0 0.0
      %1311 = vmatpush.msra.mxu0 0.0
      %1312 = vmatpush.msra.mxu0 0.0
      %1313 = vmatpush.msra.mxu0 0.0
      %1314 = vmatpush.msra.mxu0 0.0
      %1315 = vmatpush.msra.mxu0 %v1290
      %1316 = vmatpush.msra.mxu0 %v1289
      %1317 = vmatpush.msra.mxu0 %v1288
      %1318 = vmatpush.msra.mxu0 %v1287
      %1319 = vmatpush.msra.mxu0 %v1286
      %1320 = vmatpush.msra.mxu0 %v1285
      %1321 = vmatpush.msra.mxu0 %v1284
      %1322 = vmatpush.msra.mxu0 %v1283
      %1323 = vmatmul.f32.gmra.mxu0 %v1296
      %v1324 = vpop.f32.mrf.mxu0
      %v1325 = vadd.f32 0.0, %v1324
      %1326 = vmatmul.f32.gmra.mxu0 %v1299
      %v1327 = vpop.f32.mrf.mxu0
      %v1328 = vadd.f32 0.0, %v1327
      %1329 = vmatmul.f32.gmra.mxu0 %v1302
      %v1330 = vpop.f32.mrf.mxu0
      %v1331 = vadd.f32 0.0, %v1330
      %1332 = vmatmul.f32.gmra.mxu0 %v1305
      %v1333 = vpop.f32.mrf.mxu0
      %v1334 = vadd.f32 0.0, %v1333
      %1335 = vdwg.mxu0
      %1336 = vst.msk [vmem:[#allocation5] sm:$0xff] %vm237, %v1325
      %1337 = vst.msk [vmem:[#allocation5 + $0x8] sm:$0xff] %vm237, %v1328
      %1338 = vst.msk [vmem:[#allocation5 + $0x10] sm:$0xff] %vm237, %v1331
      %1339 = vst.msk [vmem:[#allocation5 + $0x18] sm:$0xff] %vm237, %v1334
    $region29: #{tpu_custom_call.1} parent=1 // pred_fallthru
      _
    // Predicated region
    $region30: #{tpu_custom_call.1} parent=1 // pred_check
      _
    $region31: #{tpu_custom_call.1} parent=1 // pred_check_branch
      %1341 = sbr.rel (0) target = $region33
    $region32: #{tpu_custom_call.1} parent=1 // pred_region
      %1343 = vsyncadd [#allocation6], 0
      %s1344 = sshll.u32 [#allocation5], 4
      %s1345 = int_to_ptr.vmem [resolvable:$true] %s1344
      %s1346 = sshll.u32 %s5, 4
      %s1347 = int_to_ptr.hbm [resolvable:$true] %s1346
      %1352 = dma.vmem_to_hbm [thread:$0]  %s1345, 512, %s1347, [#allocation6], 128, 128, 8
    $region33: #{tpu_custom_call.1} parent=1 // pred_fallthru
      _
    // Predicated region
    $region34: #{tpu_custom_call.1} parent=1 // pred_check
      _
    $region35: #{tpu_custom_call.1} parent=1 // pred_check_branch
      %1354 = sbr.rel (0) target = $region37
    $region36: #{tpu_custom_call.1} parent=1 // pred_region
      %1356 = vsyncadd [#allocation8], 0
      %s1358 = sshll.u32 [#allocation7], 4
      %s1359 = int_to_ptr.vmem [resolvable:$true] %s1358
      %s1360 = sshll.u32 %s6, 4
      %s1361 = int_to_ptr.hbm [resolvable:$true] %s1360
      %1363 = dma.vmem_to_hbm [thread:$0]  %s1359, 384, %s1361, [#allocation8]
    $region37: #{tpu_custom_call.1} parent=1 // pred_fallthru
      _
    // Predicated region
    $region38: #{tpu_custom_call.1} parent=1 // pred_check
      _
    $region39: #{tpu_custom_call.1} parent=1 // pred_check_branch
      %1365 = sbr.rel (0) target = $region41
    $region40: #{tpu_custom_call.1} parent=1 // pred_region
      %1367 = dma.done [#allocation6], 512
    $region41: #{tpu_custom_call.1} parent=1 // pred_fallthru
      _
    // Predicated region
    $region42: #{tpu_custom_call.1} parent=1 // pred_check
      _
    $region43: #{tpu_custom_call.1} parent=1 // pred_check_branch
      %1369 = sbr.rel (0) target = $region45
    $region44: #{tpu_custom_call.1} parent=1 // pred_region
      %1371 = dma.done [#allocation8], 384
    $region45: #{tpu_custom_call.1} parent=1 // pred_fallthru
      _
    %1372 = vsyncpa [#allocation6], 1
    %1373 = vsyncpa [#allocation8], 1

</llo_original>
